<compile_context>
chip_gen: v7x
topology: tpu7x:2x2x1
jax: 0.10.0
libtpu: 0.0.40
codegen_flags: <defaults>
</compile_context>

<pallas_src>
import functools

import jax
import jax.numpy as jnp
from jax.experimental import pallas as pl
from jax.experimental.pallas import tpu as pltpu


# ---------------------------------------------------------------------------
# Fused encoder kernel: all RNN layers + final Linear in one pallas_call.
# ---------------------------------------------------------------------------
def encoder_kernel(*refs, num_layers, seq_len):
    """refs = (x, [w_ih_bd, w_hh_bd, b_tile] * L, fc_w_bd, fc_b_tile, out).

    Activations are lane-dense (T, B*H) slabs; weights are block-diagonal over
    the batch so every matmul is a plain 2-D `act @ W` on the MXU.
    """
    x_ref = refs[0]
    o_ref = refs[-1]
    p = refs[1:-1]

    act = x_ref[...]                                        # (T, lanes_in)
    for layer in range(num_layers):
        w_ih = p[3 * layer][...]                            # (lanes_in, B*H)
        w_hh = p[3 * layer + 1][...]                        # (B*H, B*H)
        bias = p[3 * layer + 2][...]                        # (1, B*H)

        # Hoisted input projection: one batched MXU matmul + one bias add.
        proj = jnp.dot(act, w_ih, preferred_element_type=jnp.float32) + bias

        # Serial recurrence, statically unrolled (T small); h stays in vregs.
        bh = w_hh.shape[1]
        h = jnp.zeros((1, bh), dtype=jnp.float32)
        h_steps = []
        for t in range(seq_len):
            h = jnp.tanh(
                proj[t:t + 1, :]
                + jnp.dot(h, w_hh, preferred_element_type=jnp.float32)
            )
            h_steps.append(h)
        act = jnp.concatenate(h_steps, axis=0)              # (T, B*H)

    fc_w = p[3 * num_layers][...]                           # (B*H, B*H)
    fc_b = p[3 * num_layers + 1][...]                       # (1, B*H)
    out = jnp.dot(act, fc_w, preferred_element_type=jnp.float32) + fc_b
    o_ref[...] = out.astype(o_ref.dtype)                    # one unmasked (T, B*H) store


# ---------------------------------------------------------------------------
# Wrapper: lane-dense (block-diagonal over batch) weight packing + pallas_call
# ---------------------------------------------------------------------------
def _block_diag(w, copies):
    """w: (din, dout) -> (copies*din, copies*dout) block-diagonal."""
    din, dout = w.shape
    eye = jnp.eye(copies, dtype=w.dtype)
    bd = eye[:, None, :, None] * w[None, :, None, :]        # (c, din, c, dout)
    return bd.reshape(copies * din, copies * dout)


def encoder_forward(x, params):
    """Full Encoder forward.  x: (T, B, z_dim) -> (T, B, hidden_dim)."""
    T, B, Z = x.shape
    H = params["fc_w_t"].shape[1]
    L = len(params["rnn_layers"])

    # --- pack weights lane-dense: block-diagonal over the batch ------------
    flat_params = []
    for (w_ih_t, w_hh_t, b) in params["rnn_layers"]:
        flat_params.append(_block_diag(w_ih_t, B))                      # (B*in, B*H)
        flat_params.append(_block_diag(w_hh_t, B))                      # (B*H, B*H)
        flat_params.append(jnp.tile(b.reshape(-1), (B,)).reshape(1, B * H))
    flat_params.append(_block_diag(params["fc_w_t"], B))                # (B*H, B*H)
    flat_params.append(jnp.tile(params["fc_b"].reshape(-1), (B,)).reshape(1, B * H))

    # --- lane-dense input: (T, B*Z), zero-padded up to 128 lanes -----------
    x_flat = x.reshape(T, B * Z)
    k = B * Z
    k_pad = max(128, ((k + 127) // 128) * 128)
    if k_pad != k:
        x_flat = jnp.pad(x_flat, ((0, 0), (0, k_pad - k)))
        flat_params[0] = jnp.pad(flat_params[0], ((0, k_pad - k), (0, 0)))

    n_in = 1 + len(flat_params)
    out_flat = pl.pallas_call(
        functools.partial(encoder_kernel, num_layers=L, seq_len=T),
        out_shape=jax.ShapeDtypeStruct((T, B * H), jnp.float32),
        in_specs=[pl.BlockSpec(memory_space=pltpu.MemorySpace.VMEM)] * n_in,
        out_specs=pl.BlockSpec(memory_space=pltpu.MemorySpace.VMEM),
    )(x_flat, *flat_params)

    return out_flat.reshape(T, B, H)


# ---------------------------------------------------------------------------
# Deterministic parameter construction (PyTorch-shaped, then pre-transposed)
# ---------------------------------------------------------------------------
def make_params(key, z_dim, hidden_dim, num_layer):
    params = {"rnn_layers": []}
    for layer in range(num_layer):
        in_dim = z_dim if layer == 0 else hidden_dim
        key, k1, k2, k3, k4 = jax.random.split(key, 5)
        # PyTorch shapes: weight_ih (H, in_dim), weight_hh (H, H), biases (H,)
        w_ih = jax.random.normal(k1, (hidden_dim, in_dim), jnp.float32) * 0.1
        w_hh = jax.random.normal(k2, (hidden_dim, hidden_dim), jnp.float32) * 0.1
        b_ih = jax.random.normal(k3, (hidden_dim,), jnp.float32) * 0.1
        b_hh = jax.random.normal(k4, (hidden_dim,), jnp.float32) * 0.1
        params["rnn_layers"].append(
            (w_ih.T, w_hh.T, (b_ih + b_hh).reshape(1, hidden_dim))
        )
    key, k5, k6 = jax.random.split(key, 3)
    fc_w = jax.random.normal(k5, (hidden_dim, hidden_dim), jnp.float32) * 0.1
    fc_b = jax.random.normal(k6, (hidden_dim,), jnp.float32) * 0.1
    params["fc_w_t"] = fc_w.T
    params["fc_b"] = fc_b.reshape(1, hidden_dim)
    return params


def encoder_reference(x, params):
    """Pure-JAX reference (same math as PyTorch nn.RNN + nn.Linear)."""
    T, B, _ = x.shape
    h_seq = x
    for (w_ih_t, w_hh_t, b) in params["rnn_layers"]:
        H = w_hh_t.shape[0]
        h = jnp.zeros((B, H), jnp.float32)
        outs = []
        for t in range(T):
            h = jnp.tanh(h_seq[t] @ w_ih_t + h @ w_hh_t + b)
            outs.append(h)
        h_seq = jnp.stack(outs, axis=0)
    return h_seq @ params["fc_w_t"] + params["fc_b"]


# ---------------------------------------------------------------------------
if __name__ == "__main__":
    # Small shapes consistent with the module: seq=8, batch=4, z_dim=16,
    # hidden_dim=32, num_layer=2.  (B*H = 128 -> exactly one lane-dense slab.)
    T, B, Z, H, L = 8, 4, 16, 32, 2

    key = jax.random.PRNGKey(0)
    key, kx = jax.random.split(key)
    x = jax.random.normal(kx, (T, B, Z), jnp.float32)       # layout: (T, B, Z)

    params = make_params(key, Z, H, L)

    out = encoder_forward(x, params)
    out = jax.block_until_ready(out)

    ref = encoder_reference(x, params)
    assert out.shape == (T, B, H)
    # Tolerance covers possible differences in default f32-matmul MXU precision
    # (bf16 passes) between the Mosaic kernel and the XLA reference path.
    assert jnp.allclose(out, ref, atol=5e-3, rtol=5e-3), "mismatch vs reference"

    print("KERNEL_OK")
</pallas_src>

<mosaic_0001>
module attributes {stable_mosaic.version = 11 : i64} {
  func.func @encoder_kernel(%arg0: memref<8x128xf32, #tpu.memory_space<vmem>>, %arg1: memref<128x128xf32, #tpu.memory_space<vmem>>, %arg2: memref<128x128xf32, #tpu.memory_space<vmem>>, %arg3: memref<1x128xf32, #tpu.memory_space<vmem>>, %arg4: memref<128x128xf32, #tpu.memory_space<vmem>>, %arg5: memref<128x128xf32, #tpu.memory_space<vmem>>, %arg6: memref<1x128xf32, #tpu.memory_space<vmem>>, %arg7: memref<128x128xf32, #tpu.memory_space<vmem>>, %arg8: memref<1x128xf32, #tpu.memory_space<vmem>>, %arg9: memref<8x128xf32, #tpu.memory_space<vmem>>) attributes {dimension_semantics = [], scalar_prefetch = 0 : i64, scratch_operands = 0 : i64, tpu.core_type = #tpu.core_type<tc>} {
    %c0 = arith.constant 0 : index
    %c0_0 = arith.constant 0 : index
    %0 = vector.load %arg0[%c0, %c0_0] : memref<8x128xf32, #tpu.memory_space<vmem>>, vector<8x128xf32>
    %c0_1 = arith.constant 0 : index
    %c0_2 = arith.constant 0 : index
    %1 = vector.load %arg1[%c0_1, %c0_2] : memref<128x128xf32, #tpu.memory_space<vmem>>, vector<128x128xf32>
    %c0_3 = arith.constant 0 : index
    %c0_4 = arith.constant 0 : index
    %2 = vector.load %arg2[%c0_3, %c0_4] : memref<128x128xf32, #tpu.memory_space<vmem>>, vector<128x128xf32>
    %c0_5 = arith.constant 0 : index
    %c0_6 = arith.constant 0 : index
    %3 = vector.load %arg3[%c0_5, %c0_6] : memref<1x128xf32, #tpu.memory_space<vmem>>, vector<1x128xf32>
    %cst = arith.constant dense<0.000000e+00> : vector<8x128xf32>
    %4 = tpu.matmul %0, %1, %cst {dimension_numbers = #tpu.dot_dimension_numbers<[1], [0], [0], [1], [0, 0, 1, 1], [], []>} : vector<8x128xf32>, vector<128x128xf32>, vector<8x128xf32> -> vector<8x128xf32>
    %5 = vector.broadcast %3 : vector<1x128xf32> to vector<8x128xf32>
    %6 = arith.addf %4, %5 : vector<8x128xf32>
    %cst_7 = arith.constant 0.000000e+00 : f32
    %7 = vector.broadcast %cst_7 : f32 to vector<1x128xf32>
    %8 = vector.extract_strided_slice %6 {offsets = [0, 0], sizes = [1, 128], strides = [1, 1]} : vector<8x128xf32> to vector<1x128xf32>
    %cst_8 = arith.constant dense<0.000000e+00> : vector<1x128xf32>
    %9 = tpu.matmul %7, %2, %cst_8 {dimension_numbers = #tpu.dot_dimension_numbers<[1], [0], [0], [1], [0, 0, 1, 1], [], []>} : vector<1x128xf32>, vector<128x128xf32>, vector<1x128xf32> -> vector<1x128xf32>
    %10 = arith.addf %8, %9 : vector<1x128xf32>
    %11 = math.tanh %10 : vector<1x128xf32>
    %12 = vector.extract_strided_slice %6 {offsets = [1, 0], sizes = [1, 128], strides = [1, 1]} : vector<8x128xf32> to vector<1x128xf32>
    %cst_9 = arith.constant dense<0.000000e+00> : vector<1x128xf32>
    %13 = tpu.matmul %11, %2, %cst_9 {dimension_numbers = #tpu.dot_dimension_numbers<[1], [0], [0], [1], [0, 0, 1, 1], [], []>} : vector<1x128xf32>, vector<128x128xf32>, vector<1x128xf32> -> vector<1x128xf32>
    %14 = arith.addf %12, %13 : vector<1x128xf32>
    %15 = math.tanh %14 : vector<1x128xf32>
    %16 = vector.extract_strided_slice %6 {offsets = [2, 0], sizes = [1, 128], strides = [1, 1]} : vector<8x128xf32> to vector<1x128xf32>
    %cst_10 = arith.constant dense<0.000000e+00> : vector<1x128xf32>
    %17 = tpu.matmul %15, %2, %cst_10 {dimension_numbers = #tpu.dot_dimension_numbers<[1], [0], [0], [1], [0, 0, 1, 1], [], []>} : vector<1x128xf32>, vector<128x128xf32>, vector<1x128xf32> -> vector<1x128xf32>
    %18 = arith.addf %16, %17 : vector<1x128xf32>
    %19 = math.tanh %18 : vector<1x128xf32>
    %20 = vector.extract_strided_slice %6 {offsets = [3, 0], sizes = [1, 128], strides = [1, 1]} : vector<8x128xf32> to vector<1x128xf32>
    %cst_11 = arith.constant dense<0.000000e+00> : vector<1x128xf32>
    %21 = tpu.matmul %19, %2, %cst_11 {dimension_numbers = #tpu.dot_dimension_numbers<[1], [0], [0], [1], [0, 0, 1, 1], [], []>} : vector<1x128xf32>, vector<128x128xf32>, vector<1x128xf32> -> vector<1x128xf32>
    %22 = arith.addf %20, %21 : vector<1x128xf32>
    %23 = math.tanh %22 : vector<1x128xf32>
    %24 = vector.extract_strided_slice %6 {offsets = [4, 0], sizes = [1, 128], strides = [1, 1]} : vector<8x128xf32> to vector<1x128xf32>
    %cst_12 = arith.constant dense<0.000000e+00> : vector<1x128xf32>
    %25 = tpu.matmul %23, %2, %cst_12 {dimension_numbers = #tpu.dot_dimension_numbers<[1], [0], [0], [1], [0, 0, 1, 1], [], []>} : vector<1x128xf32>, vector<128x128xf32>, vector<1x128xf32> -> vector<1x128xf32>
    %26 = arith.addf %24, %25 : vector<1x128xf32>
    %27 = math.tanh %26 : vector<1x128xf32>
    %28 = vector.extract_strided_slice %6 {offsets = [5, 0], sizes = [1, 128], strides = [1, 1]} : vector<8x128xf32> to vector<1x128xf32>
    %cst_13 = arith.constant dense<0.000000e+00> : vector<1x128xf32>
    %29 = tpu.matmul %27, %2, %cst_13 {dimension_numbers = #tpu.dot_dimension_numbers<[1], [0], [0], [1], [0, 0, 1, 1], [], []>} : vector<1x128xf32>, vector<128x128xf32>, vector<1x128xf32> -> vector<1x128xf32>
    %30 = arith.addf %28, %29 : vector<1x128xf32>
    %31 = math.tanh %30 : vector<1x128xf32>
    %32 = vector.extract_strided_slice %6 {offsets = [6, 0], sizes = [1, 128], strides = [1, 1]} : vector<8x128xf32> to vector<1x128xf32>
    %cst_14 = arith.constant dense<0.000000e+00> : vector<1x128xf32>
    %33 = tpu.matmul %31, %2, %cst_14 {dimension_numbers = #tpu.dot_dimension_numbers<[1], [0], [0], [1], [0, 0, 1, 1], [], []>} : vector<1x128xf32>, vector<128x128xf32>, vector<1x128xf32> -> vector<1x128xf32>
    %34 = arith.addf %32, %33 : vector<1x128xf32>
    %35 = math.tanh %34 : vector<1x128xf32>
    %36 = vector.extract_strided_slice %6 {offsets = [7, 0], sizes = [1, 128], strides = [1, 1]} : vector<8x128xf32> to vector<1x128xf32>
    %cst_15 = arith.constant dense<0.000000e+00> : vector<1x128xf32>
    %37 = tpu.matmul %35, %2, %cst_15 {dimension_numbers = #tpu.dot_dimension_numbers<[1], [0], [0], [1], [0, 0, 1, 1], [], []>} : vector<1x128xf32>, vector<128x128xf32>, vector<1x128xf32> -> vector<1x128xf32>
    %38 = arith.addf %36, %37 : vector<1x128xf32>
    %39 = math.tanh %38 : vector<1x128xf32>
    %40 = tpu.concatenate %11, %15, %19, %23, %27, %31, %35, %39 in 0 : vector<1x128xf32>, vector<1x128xf32>, vector<1x128xf32>, vector<1x128xf32>, vector<1x128xf32>, vector<1x128xf32>, vector<1x128xf32>, vector<1x128xf32> -> vector<8x128xf32>
    %c0_16 = arith.constant 0 : index
    %c0_17 = arith.constant 0 : index
    %41 = vector.load %arg4[%c0_16, %c0_17] : memref<128x128xf32, #tpu.memory_space<vmem>>, vector<128x128xf32>
    %c0_18 = arith.constant 0 : index
    %c0_19 = arith.constant 0 : index
    %42 = vector.load %arg5[%c0_18, %c0_19] : memref<128x128xf32, #tpu.memory_space<vmem>>, vector<128x128xf32>
    %c0_20 = arith.constant 0 : index
    %c0_21 = arith.constant 0 : index
    %43 = vector.load %arg6[%c0_20, %c0_21] : memref<1x128xf32, #tpu.memory_space<vmem>>, vector<1x128xf32>
    %cst_22 = arith.constant dense<0.000000e+00> : vector<8x128xf32>
    %44 = tpu.matmul %40, %41, %cst_22 {dimension_numbers = #tpu.dot_dimension_numbers<[1], [0], [0], [1], [0, 0, 1, 1], [], []>} : vector<8x128xf32>, vector<128x128xf32>, vector<8x128xf32> -> vector<8x128xf32>
    %45 = vector.broadcast %43 : vector<1x128xf32> to vector<8x128xf32>
    %46 = arith.addf %44, %45 : vector<8x128xf32>
    %cst_23 = arith.constant 0.000000e+00 : f32
    %47 = vector.broadcast %cst_23 : f32 to vector<1x128xf32>
    %48 = vector.extract_strided_slice %46 {offsets = [0, 0], sizes = [1, 128], strides = [1, 1]} : vector<8x128xf32> to vector<1x128xf32>
    %cst_24 = arith.constant dense<0.000000e+00> : vector<1x128xf32>
    %49 = tpu.matmul %47, %42, %cst_24 {dimension_numbers = #tpu.dot_dimension_numbers<[1], [0], [0], [1], [0, 0, 1, 1], [], []>} : vector<1x128xf32>, vector<128x128xf32>, vector<1x128xf32> -> vector<1x128xf32>
    %50 = arith.addf %48, %49 : vector<1x128xf32>
    %51 = math.tanh %50 : vector<1x128xf32>
    %52 = vector.extract_strided_slice %46 {offsets = [1, 0], sizes = [1, 128], strides = [1, 1]} : vector<8x128xf32> to vector<1x128xf32>
    %cst_25 = arith.constant dense<0.000000e+00> : vector<1x128xf32>
    %53 = tpu.matmul %51, %42, %cst_25 {dimension_numbers = #tpu.dot_dimension_numbers<[1], [0], [0], [1], [0, 0, 1, 1], [], []>} : vector<1x128xf32>, vector<128x128xf32>, vector<1x128xf32> -> vector<1x128xf32>
    %54 = arith.addf %52, %53 : vector<1x128xf32>
    %55 = math.tanh %54 : vector<1x128xf32>
    %56 = vector.extract_strided_slice %46 {offsets = [2, 0], sizes = [1, 128], strides = [1, 1]} : vector<8x128xf32> to vector<1x128xf32>
    %cst_26 = arith.constant dense<0.000000e+00> : vector<1x128xf32>
    %57 = tpu.matmul %55, %42, %cst_26 {dimension_numbers = #tpu.dot_dimension_numbers<[1], [0], [0], [1], [0, 0, 1, 1], [], []>} : vector<1x128xf32>, vector<128x128xf32>, vector<1x128xf32> -> vector<1x128xf32>
    %58 = arith.addf %56, %57 : vector<1x128xf32>
    %59 = math.tanh %58 : vector<1x128xf32>
    %60 = vector.extract_strided_slice %46 {offsets = [3, 0], sizes = [1, 128], strides = [1, 1]} : vector<8x128xf32> to vector<1x128xf32>
    %cst_27 = arith.constant dense<0.000000e+00> : vector<1x128xf32>
    %61 = tpu.matmul %59, %42, %cst_27 {dimension_numbers = #tpu.dot_dimension_numbers<[1], [0], [0], [1], [0, 0, 1, 1], [], []>} : vector<1x128xf32>, vector<128x128xf32>, vector<1x128xf32> -> vector<1x128xf32>
    %62 = arith.addf %60, %61 : vector<1x128xf32>
    %63 = math.tanh %62 : vector<1x128xf32>
    %64 = vector.extract_strided_slice %46 {offsets = [4, 0], sizes = [1, 128], strides = [1, 1]} : vector<8x128xf32> to vector<1x128xf32>
    %cst_28 = arith.constant dense<0.000000e+00> : vector<1x128xf32>
    %65 = tpu.matmul %63, %42, %cst_28 {dimension_numbers = #tpu.dot_dimension_numbers<[1], [0], [0], [1], [0, 0, 1, 1], [], []>} : vector<1x128xf32>, vector<128x128xf32>, vector<1x128xf32> -> vector<1x128xf32>
    %66 = arith.addf %64, %65 : vector<1x128xf32>
    %67 = math.tanh %66 : vector<1x128xf32>
    %68 = vector.extract_strided_slice %46 {offsets = [5, 0], sizes = [1, 128], strides = [1, 1]} : vector<8x128xf32> to vector<1x128xf32>
    %cst_29 = arith.constant dense<0.000000e+00> : vector<1x128xf32>
    %69 = tpu.matmul %67, %42, %cst_29 {dimension_numbers = #tpu.dot_dimension_numbers<[1], [0], [0], [1], [0, 0, 1, 1], [], []>} : vector<1x128xf32>, vector<128x128xf32>, vector<1x128xf32> -> vector<1x128xf32>
    %70 = arith.addf %68, %69 : vector<1x128xf32>
    %71 = math.tanh %70 : vector<1x128xf32>
    %72 = vector.extract_strided_slice %46 {offsets = [6, 0], sizes = [1, 128], strides = [1, 1]} : vector<8x128xf32> to vector<1x128xf32>
    %cst_30 = arith.constant dense<0.000000e+00> : vector<1x128xf32>
    %73 = tpu.matmul %71, %42, %cst_30 {dimension_numbers = #tpu.dot_dimension_numbers<[1], [0], [0], [1], [0, 0, 1, 1], [], []>} : vector<1x128xf32>, vector<128x128xf32>, vector<1x128xf32> -> vector<1x128xf32>
    %74 = arith.addf %72, %73 : vector<1x128xf32>
    %75 = math.tanh %74 : vector<1x128xf32>
    %76 = vector.extract_strided_slice %46 {offsets = [7, 0], sizes = [1, 128], strides = [1, 1]} : vector<8x128xf32> to vector<1x128xf32>
    %cst_31 = arith.constant dense<0.000000e+00> : vector<1x128xf32>
    %77 = tpu.matmul %75, %42, %cst_31 {dimension_numbers = #tpu.dot_dimension_numbers<[1], [0], [0], [1], [0, 0, 1, 1], [], []>} : vector<1x128xf32>, vector<128x128xf32>, vector<1x128xf32> -> vector<1x128xf32>
    %78 = arith.addf %76, %77 : vector<1x128xf32>
    %79 = math.tanh %78 : vector<1x128xf32>
    %80 = tpu.concatenate %51, %55, %59, %63, %67, %71, %75, %79 in 0 : vector<1x128xf32>, vector<1x128xf32>, vector<1x128xf32>, vector<1x128xf32>, vector<1x128xf32>, vector<1x128xf32>, vector<1x128xf32>, vector<1x128xf32> -> vector<8x128xf32>
    %c0_32 = arith.constant 0 : index
    %c0_33 = arith.constant 0 : index
    %81 = vector.load %arg7[%c0_32, %c0_33] : memref<128x128xf32, #tpu.memory_space<vmem>>, vector<128x128xf32>
    %c0_34 = arith.constant 0 : index
    %c0_35 = arith.constant 0 : index
    %82 = vector.load %arg8[%c0_34, %c0_35] : memref<1x128xf32, #tpu.memory_space<vmem>>, vector<1x128xf32>
    %cst_36 = arith.constant dense<0.000000e+00> : vector<8x128xf32>
    %83 = tpu.matmul %80, %81, %cst_36 {dimension_numbers = #tpu.dot_dimension_numbers<[1], [0], [0], [1], [0, 0, 1, 1], [], []>} : vector<8x128xf32>, vector<128x128xf32>, vector<8x128xf32> -> vector<8x128xf32>
    %84 = vector.broadcast %82 : vector<1x128xf32> to vector<8x128xf32>
    %85 = arith.addf %83, %84 : vector<8x128xf32>
    %c0_37 = arith.constant 0 : index
    %c0_38 = arith.constant 0 : index
    %86 = vector.load %arg9[%c0_37, %c0_38] : memref<8x128xf32, #tpu.memory_space<vmem>>, vector<8x128xf32>
    tpu.vector_store %arg9[%c0_37, %c0_38], %85 {strides = array<i32>} : memref<8x128xf32, #tpu.memory_space<vmem>>, vector<8x128xf32>,
    return
  }
}

</mosaic_0001>

<llo_original>
// kernel: tpu_custom_call.1
$region0: #{tpu_custom_call.1}
  #allocation0 [shape = 'u32[]', space=smem, size = 0x4, offset = 0x4, fixed_abs, tag = 'smem constant byte address 0x4 - core index']
  #allocation1 [shape = 'u32[144,128]{1,0:T(1,128)}', space=vmem, size = 0x12000, scoped, tag = 'internal scratch']
  %s0 = inlined_call_operand.hbm [shape: f32[8,128], index: 0, kind: input, shape index: {}]
  %s1 = inlined_call_operand.hbm [shape: f32[128,128], index: 1, kind: input, shape index: {}]
  %s2 = inlined_call_operand.hbm [shape: f32[128,128], index: 2, kind: input, shape index: {}]
  %s3 = inlined_call_operand.vmem [shape: f32[1,128], index: 3, kind: input, shape index: {}]
  %s4 = inlined_call_operand.hbm [shape: f32[128,128], index: 4, kind: input, shape index: {}]
  %s5 = inlined_call_operand.hbm [shape: f32[128,128], index: 5, kind: input, shape index: {}]
  %s6 = inlined_call_operand.vmem [shape: f32[1,128], index: 6, kind: input, shape index: {}]
  %s7 = inlined_call_operand.hbm [shape: f32[128,128], index: 7, kind: input, shape index: {}]
  %s8 = inlined_call_operand.vmem [shape: f32[1,128], index: 8, kind: input, shape index: {}]
  %s9 = inlined_call_operand.hbm [shape: f32[8,128], index: 9, kind: output, shape index: {}]
  %s10 = sld [smem:[#allocation0]]
  $region70: #{tpu_custom_call.1} parent=0
    _
  %s12 = ssub.s32 1, %s10
  %s13 = scalar_select 0, %s12, %s10
  $region1: #{tpu_custom_call.1} parent=0
    #allocation2 [shape = 'u8[4096]{0}', space=vmem, size = 0x1000, scoped, tag = 'input window, operand 0, single buffered']
    #allocation3 [shape = 's32[1]{0}', space=sflag, size = 0x4, scoped, tag = 'scoped memory for tpu_custom_call.1']
    #allocation4 [shape = 's32[1]{0}', space=sflag, size = 0x4, scoped, tag = 'scoped memory for tpu_custom_call.1']
    #allocation5 [shape = 'u8[65536]{0}', space=vmem, size = 0x10000, scoped, tag = 'input window, operand 1, single buffered']
    #allocation6 [shape = 's32[1]{0}', space=sflag, size = 0x4, scoped, tag = 'scoped memory for tpu_custom_call.1']
    #allocation7 [shape = 'u8[65536]{0}', space=vmem, size = 0x10000, scoped, tag = 'input window, operand 2, single buffered']
    #allocation8 [shape = 'u8[65536]{0}', space=vmem, size = 0x10000, scoped, tag = 'input window, operand 4, single buffered']
    #allocation9 [shape = 's32[1]{0}', space=sflag, size = 0x4, scoped, tag = 'scoped memory for tpu_custom_call.1']
    #allocation10 [shape = 'u8[65536]{0}', space=vmem, size = 0x10000, scoped, tag = 'input window, operand 5, single buffered']
    #allocation11 [shape = 'u8[65536]{0}', space=vmem, size = 0x10000, scoped, tag = 'input window, operand 7, single buffered']
    #allocation12 [shape = 's32[1]{0}', space=sflag, size = 0x4, scoped, tag = 'scoped memory for tpu_custom_call.1']
    #allocation13 [shape = 'u8[4096]{0}', space=vmem, size = 0x1000, scoped, tag = 'output window, operand 0, single buffered']
    %14 = vsyncpa [#allocation3], 0
    %15 = vsyncpa [#allocation6], 0
    %16 = vsyncpa [#allocation9], 0
    %17 = vsyncpa [#allocation12], 0
    %18 = vsyncpa [#allocation4], 0
    // Predicated region
    $region2: #{tpu_custom_call.1} parent=1 // pred_check
      _
    $region3: #{tpu_custom_call.1} parent=1 // pred_check_branch
      %20 = sbr.rel (0) target = $region5
    $region4: #{tpu_custom_call.1} parent=1 // pred_region
      %s22 = ssub.s32 128, 128
      %23 = vsyncadd [#allocation3], %s22
      %s25 = sshll.u32 [#allocation2], 4
      %s26 = int_to_ptr.vmem [resolvable:$true] %s25
      %28 = dma.hbm_to_vmem [thread:$0]  %s0, 128, %s26, [#allocation3]
    $region5: #{tpu_custom_call.1} parent=1 // pred_fallthru
      _
    // Predicated region
    $region6: #{tpu_custom_call.1} parent=1 // pred_check
      _
    $region7: #{tpu_custom_call.1} parent=1 // pred_check_branch
      %30 = sbr.rel (0) target = $region9
    $region8: #{tpu_custom_call.1} parent=1 // pred_region
      %s32 = ssub.s32 2048, 2048
      %33 = vsyncadd [#allocation6], %s32
      %s34 = sshll.u32 [#allocation5], 4
      %s35 = int_to_ptr.vmem [resolvable:$true] %s34
      %40 = dma.hbm_to_vmem [thread:$0]  %s1, 2048, %s35, [#allocation6], 128, 128, 8
    $region9: #{tpu_custom_call.1} parent=1 // pred_fallthru
      _
    // Predicated region
    $region10: #{tpu_custom_call.1} parent=1 // pred_check
      _
    $region11: #{tpu_custom_call.1} parent=1 // pred_check_branch
      %42 = sbr.rel (0) target = $region13
    $region12: #{tpu_custom_call.1} parent=1 // pred_region
      %s44 = ssub.s32 2048, 2048
      %45 = vsyncadd [#allocation6], %s44
      %s46 = sshll.u32 [#allocation7], 4
      %s47 = int_to_ptr.vmem [resolvable:$true] %s46
      %52 = dma.hbm_to_vmem [thread:$0]  %s2, 2048, %s47, [#allocation6], 128, 128, 8
    $region13: #{tpu_custom_call.1} parent=1 // pred_fallthru
      _
    // Predicated region
    $region14: #{tpu_custom_call.1} parent=1 // pred_check
      _
    $region15: #{tpu_custom_call.1} parent=1 // pred_check_branch
      %54 = sbr.rel (0) target = $region17
    $region16: #{tpu_custom_call.1} parent=1 // pred_region
      _
    $region17: #{tpu_custom_call.1} parent=1 // pred_fallthru
      _
    // Predicated region
    $region18: #{tpu_custom_call.1} parent=1 // pred_check
      _
    $region19: #{tpu_custom_call.1} parent=1 // pred_check_branch
      %56 = sbr.rel (0) target = $region21
    $region20: #{tpu_custom_call.1} parent=1 // pred_region
      %s58 = ssub.s32 2048, 2048
      %59 = vsyncadd [#allocation9], %s58
      %s60 = sshll.u32 [#allocation8], 4
      %s61 = int_to_ptr.vmem [resolvable:$true] %s60
      %66 = dma.hbm_to_vmem [thread:$0]  %s4, 2048, %s61, [#allocation9], 128, 128, 8
    $region21: #{tpu_custom_call.1} parent=1 // pred_fallthru
      _
    // Predicated region
    $region22: #{tpu_custom_call.1} parent=1 // pred_check
      _
    $region23: #{tpu_custom_call.1} parent=1 // pred_check_branch
      %68 = sbr.rel (0) target = $region25
    $region24: #{tpu_custom_call.1} parent=1 // pred_region
      %s70 = ssub.s32 2048, 2048
      %71 = vsyncadd [#allocation9], %s70
      %s72 = sshll.u32 [#allocation10], 4
      %s73 = int_to_ptr.vmem [resolvable:$true] %s72
      %78 = dma.hbm_to_vmem [thread:$0]  %s5, 2048, %s73, [#allocation9], 128, 128, 8
    $region25: #{tpu_custom_call.1} parent=1 // pred_fallthru
      _
    // Predicated region
    $region26: #{tpu_custom_call.1} parent=1 // pred_check
      _
    $region27: #{tpu_custom_call.1} parent=1 // pred_check_branch
      %80 = sbr.rel (0) target = $region29
    $region28: #{tpu_custom_call.1} parent=1 // pred_region
      _
    $region29: #{tpu_custom_call.1} parent=1 // pred_fallthru
      _
    // Predicated region
    $region30: #{tpu_custom_call.1} parent=1 // pred_check
      _
    $region31: #{tpu_custom_call.1} parent=1 // pred_check_branch
      %82 = sbr.rel (0) target = $region33
    $region32: #{tpu_custom_call.1} parent=1 // pred_region
      %s84 = ssub.s32 2048, 2048
      %85 = vsyncadd [#allocation12], %s84
      %s86 = sshll.u32 [#allocation11], 4
      %s87 = int_to_ptr.vmem [resolvable:$true] %s86
      %92 = dma.hbm_to_vmem [thread:$0]  %s7, 2048, %s87, [#allocation12], 128, 128, 8
    $region33: #{tpu_custom_call.1} parent=1 // pred_fallthru
      _
    // Predicated region
    $region34: #{tpu_custom_call.1} parent=1 // pred_check
      _
    $region35: #{tpu_custom_call.1} parent=1 // pred_check_branch
      %94 = sbr.rel (0) target = $region37
    $region36: #{tpu_custom_call.1} parent=1 // pred_region
      _
    $region37: #{tpu_custom_call.1} parent=1 // pred_fallthru
      _
    // Predicated region
    $region38: #{tpu_custom_call.1} parent=1 // pred_check
      _
    $region39: #{tpu_custom_call.1} parent=1 // pred_check_branch
      %96 = sbr.rel (0) target = $region41
    $region40: #{tpu_custom_call.1} parent=1 // pred_region
      %97 = dma.done [#allocation3], 128
    $region41: #{tpu_custom_call.1} parent=1 // pred_fallthru
      _
    // Predicated region
    $region42: #{tpu_custom_call.1} parent=1 // pred_check
      _
    $region43: #{tpu_custom_call.1} parent=1 // pred_check_branch
      %99 = sbr.rel (0) target = $region45
    $region44: #{tpu_custom_call.1} parent=1 // pred_region
      %100 = dma.done [#allocation6], 2048
    $region45: #{tpu_custom_call.1} parent=1 // pred_fallthru
      _
    // Predicated region
    $region46: #{tpu_custom_call.1} parent=1 // pred_check
      _
    $region47: #{tpu_custom_call.1} parent=1 // pred_check_branch
      %102 = sbr.rel (0) target = $region49
    $region48: #{tpu_custom_call.1} parent=1 // pred_region
      %103 = dma.done [#allocation6], 2048
    $region49: #{tpu_custom_call.1} parent=1 // pred_fallthru
      _
    // Predicated region
    $region50: #{tpu_custom_call.1} parent=1 // pred_check
      _
    $region51: #{tpu_custom_call.1} parent=1 // pred_check_branch
      %105 = sbr.rel (0) target = $region53
    $region52: #{tpu_custom_call.1} parent=1 // pred_region
      %106 = dma.done [#allocation9], 2048
    $region53: #{tpu_custom_call.1} parent=1 // pred_fallthru
      _
    // Predicated region
    $region54: #{tpu_custom_call.1} parent=1 // pred_check
      _
    $region55: #{tpu_custom_call.1} parent=1 // pred_check_branch
      %108 = sbr.rel (0) target = $region57
    $region56: #{tpu_custom_call.1} parent=1 // pred_region
      %109 = dma.done [#allocation9], 2048
    $region57: #{tpu_custom_call.1} parent=1 // pred_fallthru
      _
    // Predicated region
    $region58: #{tpu_custom_call.1} parent=1 // pred_check
      _
    $region59: #{tpu_custom_call.1} parent=1 // pred_check_branch
      %111 = sbr.rel (0) target = $region61
    $region60: #{tpu_custom_call.1} parent=1 // pred_region
      %112 = dma.done [#allocation12], 2048
    $region61: #{tpu_custom_call.1} parent=1 // pred_fallthru
      _
    %v113 = vld [vmem:[#allocation2] sm:$0xff]
    %v114 = vld [vmem:[#allocation5] sm:$0xff]
    %v115 = vld [vmem:[#allocation5 + $0x8] sm:$0xff]
    %v116 = vld [vmem:[#allocation5 + $0x10] sm:$0xff]
    %v117 = vld [vmem:[#allocation5 + $0x18] sm:$0xff]
    %v118 = vld [vmem:[#allocation5 + $0x20] sm:$0xff]
    %v119 = vld [vmem:[#allocation5 + $0x28] sm:$0xff]
    %v120 = vld [vmem:[#allocation5 + $0x30] sm:$0xff]
    %v121 = vld [vmem:[#allocation5 + $0x38] sm:$0xff]
    %v122 = vld [vmem:[#allocation5 + $0x40] sm:$0xff]
    %v123 = vld [vmem:[#allocation5 + $0x48] sm:$0xff]
    %v124 = vld [vmem:[#allocation5 + $0x50] sm:$0xff]
    %v125 = vld [vmem:[#allocation5 + $0x58] sm:$0xff]
    %v126 = vld [vmem:[#allocation5 + $0x60] sm:$0xff]
    %v127 = vld [vmem:[#allocation5 + $0x68] sm:$0xff]
    %v128 = vld [vmem:[#allocation5 + $0x70] sm:$0xff]
    %v129 = vld [vmem:[#allocation5 + $0x78] sm:$0xff]
    %v130 = vld [vmem:[#allocation7] sm:$0xff]
    %v131 = vld [vmem:[#allocation7 + $0x8] sm:$0xff]
    %v132 = vld [vmem:[#allocation7 + $0x10] sm:$0xff]
    %v133 = vld [vmem:[#allocation7 + $0x18] sm:$0xff]
    %v134 = vld [vmem:[#allocation7 + $0x20] sm:$0xff]
    %v135 = vld [vmem:[#allocation7 + $0x28] sm:$0xff]
    %v136 = vld [vmem:[#allocation7 + $0x30] sm:$0xff]
    %v137 = vld [vmem:[#allocation7 + $0x38] sm:$0xff]
    %v138 = vld [vmem:[#allocation7 + $0x40] sm:$0xff]
    %v139 = vld [vmem:[#allocation7 + $0x48] sm:$0xff]
    %v140 = vld [vmem:[#allocation7 + $0x50] sm:$0xff]
    %v141 = vld [vmem:[#allocation7 + $0x58] sm:$0xff]
    %v142 = vld [vmem:[#allocation7 + $0x60] sm:$0xff]
    %v143 = vld [vmem:[#allocation7 + $0x68] sm:$0xff]
    %v144 = vld [vmem:[#allocation7 + $0x70] sm:$0xff]
    %v145 = vld [vmem:[#allocation7 + $0x78] sm:$0xff]
    %v146 = vld [vmem:[%s3] sm:$0x1]
    %v148 = vlaneseq
    %v149 = vshrl.u32 %v148, 7
    %v150 = vsub.s32 0, %v149
    %v151 = vrot.slane %v146, %v150
    %153 = vmatprep.subr.mxu0 0.0
    %154 = vmatpush1.msra.mxu0 %v114
    %155 = vmatprep.subr.mxu0 0.0
    %156 = vmatpush1.msra.mxu0 %v115
    %157 = vmatprep.subr.mxu0 0.0
    %158 = vmatpush1.msra.mxu0 %v116
    %159 = vmatprep.subr.mxu0 0.0
    %160 = vmatpush1.msra.mxu0 %v117
    %161 = vmatprep.subr.mxu0 0.0
    %162 = vmatpush1.msra.mxu0 %v118
    %163 = vmatprep.subr.mxu0 0.0
    %164 = vmatpush1.msra.mxu0 %v119
    %165 = vmatprep.subr.mxu0 0.0
    %166 = vmatpush1.msra.mxu0 %v120
    %167 = vmatprep.subr.mxu0 0.0
    %168 = vmatpush1.msra.mxu0 %v121
    %169 = vmatprep.subr.mxu0 0.0
    %170 = vmatpush1.msra.mxu0 %v122
    %171 = vmatprep.subr.mxu0 0.0
    %172 = vmatpush1.msra.mxu0 %v123
    %173 = vmatprep.subr.mxu0 0.0
    %174 = vmatpush1.msra.mxu0 %v124
    %175 = vmatprep.subr.mxu0 0.0
    %176 = vmatpush1.msra.mxu0 %v125
    %177 = vmatprep.subr.mxu0 0.0
    %178 = vmatpush1.msra.mxu0 %v126
    %179 = vmatprep.subr.mxu0 0.0
    %180 = vmatpush1.msra.mxu0 %v127
    %181 = vmatprep.subr.mxu0 0.0
    %182 = vmatpush1.msra.mxu0 %v128
    %183 = vmatprep.subr.mxu0 0.0
    %184 = vmatpush1.msra.mxu0 %v129
    %185 = vmatprep.subr.mxu0 0.0
    %186 = vmatpush1.msra.mxu0 0.0
    %187 = vmatprep.subr.mxu0 0.0
    %188 = vmatpush1.msra.mxu0 0.0
    %189 = vmatprep.subr.mxu0 0.0
    %190 = vmatpush1.msra.mxu0 0.0
    %191 = vmatprep.subr.mxu0 0.0
    %192 = vmatpush1.msra.mxu0 0.0
    %193 = vmatprep.subr.mxu0 0.0
    %194 = vmatpush1.msra.mxu0 0.0
    %195 = vmatprep.subr.mxu0 0.0
    %196 = vmatpush1.msra.mxu0 0.0
    %197 = vmatprep.subr.mxu0 0.0
    %198 = vmatpush1.msra.mxu0 0.0
    %199 = vmatprep.subr.mxu0 0.0
    %200 = vmatpush1.msra.mxu0 0.0
    %201 = vmatprep.subr.mxu0 0.0
    %202 = vmatpush1.msra.mxu0 0.0
    %203 = vmatprep.subr.mxu0 0.0
    %204 = vmatpush1.msra.mxu0 0.0
    %205 = vmatprep.subr.mxu0 0.0
    %206 = vmatpush1.msra.mxu0 0.0
    %207 = vmatprep.subr.mxu0 0.0
    %208 = vmatpush1.msra.mxu0 0.0
    %209 = vmatprep.subr.mxu0 0.0
    %210 = vmatpush1.msra.mxu0 0.0
    %211 = vmatprep.subr.mxu0 0.0
    %212 = vmatpush1.msra.mxu0 0.0
    %213 = vmatprep.subr.mxu0 0.0
    %214 = vmatpush1.msra.mxu0 0.0
    %215 = vmatprep.subr.mxu0 0.0
    %216 = vmatpush1.msra.mxu0 0.0
    %217 = vmatprep.mubr.f32.mxu0 0.0
    %218 = vmatmul.mubr.f32.gmra.mrb[0].mxu0 %v113
    %v219 = vpop.f32.mrb[0].mxu0
    %v220 = vadd.f32 %v151, %v219
    %v221 = vpop.f32.mrb[0].mxu0
    %222 = vdwg.mxu0
    %223 = vmatprep.subr.mxu0 0.0
    %224 = vmatpush1.msra.mxu0 %v130
    %225 = vmatprep.subr.mxu0 0.0
    %226 = vmatpush1.msra.mxu0 %v131
    %227 = vmatprep.subr.mxu0 0.0
    %228 = vmatpush1.msra.mxu0 %v132
    %229 = vmatprep.subr.mxu0 0.0
    %230 = vmatpush1.msra.mxu0 %v133
    %231 = vmatprep.subr.mxu0 0.0
    %232 = vmatpush1.msra.mxu0 %v134
    %233 = vmatprep.subr.mxu0 0.0
    %234 = vmatpush1.msra.mxu0 %v135
    %235 = vmatprep.subr.mxu0 0.0
    %236 = vmatpush1.msra.mxu0 %v136
    %237 = vmatprep.subr.mxu0 0.0
    %238 = vmatpush1.msra.mxu0 %v137
    %239 = vmatprep.subr.mxu0 0.0
    %240 = vmatpush1.msra.mxu0 %v138
    %241 = vmatprep.subr.mxu0 0.0
    %242 = vmatpush1.msra.mxu0 %v139
    %243 = vmatprep.subr.mxu0 0.0
    %244 = vmatpush1.msra.mxu0 %v140
    %245 = vmatprep.subr.mxu0 0.0
    %246 = vmatpush1.msra.mxu0 %v141
    %247 = vmatprep.subr.mxu0 0.0
    %248 = vmatpush1.msra.mxu0 %v142
    %249 = vmatprep.subr.mxu0 0.0
    %250 = vmatpush1.msra.mxu0 %v143
    %251 = vmatprep.subr.mxu0 0.0
    %252 = vmatpush1.msra.mxu0 %v144
    %253 = vmatprep.subr.mxu0 0.0
    %254 = vmatpush1.msra.mxu0 %v145
    %255 = vmatprep.subr.mxu0 0.0
    %256 = vmatpush1.msra.mxu0 0.0
    %257 = vmatprep.subr.mxu0 0.0
    %258 = vmatpush1.msra.mxu0 0.0
    %259 = vmatprep.subr.mxu0 0.0
    %260 = vmatpush1.msra.mxu0 0.0
    %261 = vmatprep.subr.mxu0 0.0
    %262 = vmatpush1.msra.mxu0 0.0
    %263 = vmatprep.subr.mxu0 0.0
    %264 = vmatpush1.msra.mxu0 0.0
    %265 = vmatprep.subr.mxu0 0.0
    %266 = vmatpush1.msra.mxu0 0.0
    %267 = vmatprep.subr.mxu0 0.0
    %268 = vmatpush1.msra.mxu0 0.0
    %269 = vmatprep.subr.mxu0 0.0
    %270 = vmatpush1.msra.mxu0 0.0
    %271 = vmatprep.subr.mxu0 0.0
    %272 = vmatpush1.msra.mxu0 0.0
    %273 = vmatprep.subr.mxu0 0.0
    %274 = vmatpush1.msra.mxu0 0.0
    %275 = vmatprep.subr.mxu0 0.0
    %276 = vmatpush1.msra.mxu0 0.0
    %277 = vmatprep.subr.mxu0 0.0
    %278 = vmatpush1.msra.mxu0 0.0
    %279 = vmatprep.subr.mxu0 0.0
    %280 = vmatpush1.msra.mxu0 0.0
    %281 = vmatprep.subr.mxu0 0.0
    %282 = vmatpush1.msra.mxu0 0.0
    %283 = vmatprep.subr.mxu0 0.0
    %284 = vmatpush1.msra.mxu0 0.0
    %285 = vmatprep.subr.mxu0 0.0
    %286 = vmatpush1.msra.mxu0 0.0
    %287 = vmatprep.mubr.f32.mxu0 0.0
    %288 = vmatmul.mubr.f32.gmra.mrb[0].mxu0 0.0
    %v289 = vpop.f32.mrb[0].mxu0
    %v290 = vadd.f32 0.0, %v289
    %v291 = vpop.f32.mrb[0].mxu0
    %292 = vdwg.mxu0
    %v293 = vadd.f32 %v220, %v290
    %v294 = vtanh.pop %v293
    %295 = vmatprep.subr.mxu0 0.0
    %296 = vmatpush1.msra.mxu0 %v130
    %297 = vmatprep.subr.mxu0 0.0
    %298 = vmatpush1.msra.mxu0 %v131
    %299 = vmatprep.subr.mxu0 0.0
    %300 = vmatpush1.msra.mxu0 %v132
    %301 = vmatprep.subr.mxu0 0.0
    %302 = vmatpush1.msra.mxu0 %v133
    %303 = vmatprep.subr.mxu0 0.0
    %304 = vmatpush1.msra.mxu0 %v134
    %305 = vmatprep.subr.mxu0 0.0
    %306 = vmatpush1.msra.mxu0 %v135
    %307 = vmatprep.subr.mxu0 0.0
    %308 = vmatpush1.msra.mxu0 %v136
    %309 = vmatprep.subr.mxu0 0.0
    %310 = vmatpush1.msra.mxu0 %v137
    %311 = vmatprep.subr.mxu0 0.0
    %312 = vmatpush1.msra.mxu0 %v138
    %313 = vmatprep.subr.mxu0 0.0
    %314 = vmatpush1.msra.mxu0 %v139
    %315 = vmatprep.subr.mxu0 0.0
    %316 = vmatpush1.msra.mxu0 %v140
    %317 = vmatprep.subr.mxu0 0.0
    %318 = vmatpush1.msra.mxu0 %v141
    %319 = vmatprep.subr.mxu0 0.0
    %320 = vmatpush1.msra.mxu0 %v142
    %321 = vmatprep.subr.mxu0 0.0
    %322 = vmatpush1.msra.mxu0 %v143
    %323 = vmatprep.subr.mxu0 0.0
    %324 = vmatpush1.msra.mxu0 %v144
    %325 = vmatprep.subr.mxu0 0.0
    %326 = vmatpush1.msra.mxu0 %v145
    %327 = vmatprep.subr.mxu0 0.0
    %328 = vmatpush1.msra.mxu0 0.0
    %329 = vmatprep.subr.mxu0 0.0
    %330 = vmatpush1.msra.mxu0 0.0
    %331 = vmatprep.subr.mxu0 0.0
    %332 = vmatpush1.msra.mxu0 0.0
    %333 = vmatprep.subr.mxu0 0.0
    %334 = vmatpush1.msra.mxu0 0.0
    %335 = vmatprep.subr.mxu0 0.0
    %336 = vmatpush1.msra.mxu0 0.0
    %337 = vmatprep.subr.mxu0 0.0
    %338 = vmatpush1.msra.mxu0 0.0
    %339 = vmatprep.subr.mxu0 0.0
    %340 = vmatpush1.msra.mxu0 0.0
    %341 = vmatprep.subr.mxu0 0.0
    %342 = vmatpush1.msra.mxu0 0.0
    %343 = vmatprep.subr.mxu0 0.0
    %344 = vmatpush1.msra.mxu0 0.0
    %345 = vmatprep.subr.mxu0 0.0
    %346 = vmatpush1.msra.mxu0 0.0
    %347 = vmatprep.subr.mxu0 0.0
    %348 = vmatpush1.msra.mxu0 0.0
    %349 = vmatprep.subr.mxu0 0.0
    %350 = vmatpush1.msra.mxu0 0.0
    %351 = vmatprep.subr.mxu0 0.0
    %352 = vmatpush1.msra.mxu0 0.0
    %353 = vmatprep.subr.mxu0 0.0
    %354 = vmatpush1.msra.mxu0 0.0
    %355 = vmatprep.subr.mxu0 0.0
    %356 = vmatpush1.msra.mxu0 0.0
    %357 = vmatprep.subr.mxu0 0.0
    %358 = vmatpush1.msra.mxu0 0.0
    %359 = vmatprep.mubr.f32.mxu0 0.0
    %360 = vmatmul.mubr.f32.gmra.mrb[0].mxu0 %v294
    %v361 = vpop.f32.mrb[0].mxu0
    %v362 = vadd.f32 0.0, %v361
    %v363 = vpop.f32.mrb[0].mxu0
    %364 = vdwg.mxu0
    %v366 = vrot.slane %v362, 7
    %v368 = vadd.f32 %v220, %v366
    %v369 = vtanh.pop %v368
    %v371 = vrot.slane %v369, 1
    %373 = vmatprep.subr.mxu0 0.0
    %374 = vmatpush1.msra.mxu0 %v130
    %375 = vmatprep.subr.mxu0 0.0
    %376 = vmatpush1.msra.mxu0 %v131
    %377 = vmatprep.subr.mxu0 0.0
    %378 = vmatpush1.msra.mxu0 %v132
    %379 = vmatprep.subr.mxu0 0.0
    %380 = vmatpush1.msra.mxu0 %v133
    %381 = vmatprep.subr.mxu0 0.0
    %382 = vmatpush1.msra.mxu0 %v134
    %383 = vmatprep.subr.mxu0 0.0
    %384 = vmatpush1.msra.mxu0 %v135
    %385 = vmatprep.subr.mxu0 0.0
    %386 = vmatpush1.msra.mxu0 %v136
    %387 = vmatprep.subr.mxu0 0.0
    %388 = vmatpush1.msra.mxu0 %v137
    %389 = vmatprep.subr.mxu0 0.0
    %390 = vmatpush1.msra.mxu0 %v138
    %391 = vmatprep.subr.mxu0 0.0
    %392 = vmatpush1.msra.mxu0 %v139
    %393 = vmatprep.subr.mxu0 0.0
    %394 = vmatpush1.msra.mxu0 %v140
    %395 = vmatprep.subr.mxu0 0.0
    %396 = vmatpush1.msra.mxu0 %v141
    %397 = vmatprep.subr.mxu0 0.0
    %398 = vmatpush1.msra.mxu0 %v142
    %399 = vmatprep.subr.mxu0 0.0
    %400 = vmatpush1.msra.mxu0 %v143
    %401 = vmatprep.subr.mxu0 0.0
    %402 = vmatpush1.msra.mxu0 %v144
    %403 = vmatprep.subr.mxu0 0.0
    %404 = vmatpush1.msra.mxu0 %v145
    %405 = vmatprep.subr.mxu0 0.0
    %406 = vmatpush1.msra.mxu0 0.0
    %407 = vmatprep.subr.mxu0 0.0
    %408 = vmatpush1.msra.mxu0 0.0
    %409 = vmatprep.subr.mxu0 0.0
    %410 = vmatpush1.msra.mxu0 0.0
    %411 = vmatprep.subr.mxu0 0.0
    %412 = vmatpush1.msra.mxu0 0.0
    %413 = vmatprep.subr.mxu0 0.0
    %414 = vmatpush1.msra.mxu0 0.0
    %415 = vmatprep.subr.mxu0 0.0
    %416 = vmatpush1.msra.mxu0 0.0
    %417 = vmatprep.subr.mxu0 0.0
    %418 = vmatpush1.msra.mxu0 0.0
    %419 = vmatprep.subr.mxu0 0.0
    %420 = vmatpush1.msra.mxu0 0.0
    %421 = vmatprep.subr.mxu0 0.0
    %422 = vmatpush1.msra.mxu0 0.0
    %423 = vmatprep.subr.mxu0 0.0
    %424 = vmatpush1.msra.mxu0 0.0
    %425 = vmatprep.subr.mxu0 0.0
    %426 = vmatpush1.msra.mxu0 0.0
    %427 = vmatprep.subr.mxu0 0.0
    %428 = vmatpush1.msra.mxu0 0.0
    %429 = vmatprep.subr.mxu0 0.0
    %430 = vmatpush1.msra.mxu0 0.0
    %431 = vmatprep.subr.mxu0 0.0
    %432 = vmatpush1.msra.mxu0 0.0
    %433 = vmatprep.subr.mxu0 0.0
    %434 = vmatpush1.msra.mxu0 0.0
    %435 = vmatprep.subr.mxu0 0.0
    %436 = vmatpush1.msra.mxu0 0.0
    %437 = vmatprep.mubr.f32.mxu0 0.0
    %438 = vmatmul.mubr.f32.gmra.mrb[0].mxu0 %v371
    %v439 = vpop.f32.mrb[0].mxu0
    %v440 = vadd.f32 0.0, %v439
    %v441 = vpop.f32.mrb[0].mxu0
    %442 = vdwg.mxu0
    %v444 = vrot.slane %v440, 6
    %v446 = vadd.f32 %v220, %v444
    %v447 = vtanh.pop %v446
    %v449 = vrot.slane %v447, 2
    %451 = vmatprep.subr.mxu0 0.0
    %452 = vmatpush1.msra.mxu0 %v130
    %453 = vmatprep.subr.mxu0 0.0
    %454 = vmatpush1.msra.mxu0 %v131
    %455 = vmatprep.subr.mxu0 0.0
    %456 = vmatpush1.msra.mxu0 %v132
    %457 = vmatprep.subr.mxu0 0.0
    %458 = vmatpush1.msra.mxu0 %v133
    %459 = vmatprep.subr.mxu0 0.0
    %460 = vmatpush1.msra.mxu0 %v134
    %461 = vmatprep.subr.mxu0 0.0
    %462 = vmatpush1.msra.mxu0 %v135
    %463 = vmatprep.subr.mxu0 0.0
    %464 = vmatpush1.msra.mxu0 %v136
    %465 = vmatprep.subr.mxu0 0.0
    %466 = vmatpush1.msra.mxu0 %v137
    %467 = vmatprep.subr.mxu0 0.0
    %468 = vmatpush1.msra.mxu0 %v138
    %469 = vmatprep.subr.mxu0 0.0
    %470 = vmatpush1.msra.mxu0 %v139
    %471 = vmatprep.subr.mxu0 0.0
    %472 = vmatpush1.msra.mxu0 %v140
    %473 = vmatprep.subr.mxu0 0.0
    %474 = vmatpush1.msra.mxu0 %v141
    %475 = vmatprep.subr.mxu0 0.0
    %476 = vmatpush1.msra.mxu0 %v142
    %477 = vmatprep.subr.mxu0 0.0
    %478 = vmatpush1.msra.mxu0 %v143
    %479 = vmatprep.subr.mxu0 0.0
    %480 = vmatpush1.msra.mxu0 %v144
    %481 = vmatprep.subr.mxu0 0.0
    %482 = vmatpush1.msra.mxu0 %v145
    %483 = vmatprep.subr.mxu0 0.0
    %484 = vmatpush1.msra.mxu0 0.0
    %485 = vmatprep.subr.mxu0 0.0
    %486 = vmatpush1.msra.mxu0 0.0
    %487 = vmatprep.subr.mxu0 0.0
    %488 = vmatpush1.msra.mxu0 0.0
    %489 = vmatprep.subr.mxu0 0.0
    %490 = vmatpush1.msra.mxu0 0.0
    %491 = vmatprep.subr.mxu0 0.0
    %492 = vmatpush1.msra.mxu0 0.0
    %493 = vmatprep.subr.mxu0 0.0
    %494 = vmatpush1.msra.mxu0 0.0
    %495 = vmatprep.subr.mxu0 0.0
    %496 = vmatpush1.msra.mxu0 0.0
    %497 = vmatprep.subr.mxu0 0.0
    %498 = vmatpush1.msra.mxu0 0.0
    %499 = vmatprep.subr.mxu0 0.0
    %500 = vmatpush1.msra.mxu0 0.0
    %501 = vmatprep.subr.mxu0 0.0
    %502 = vmatpush1.msra.mxu0 0.0
    %503 = vmatprep.subr.mxu0 0.0
    %504 = vmatpush1.msra.mxu0 0.0
    %505 = vmatprep.subr.mxu0 0.0
    %506 = vmatpush1.msra.mxu0 0.0
    %507 = vmatprep.subr.mxu0 0.0
    %508 = vmatpush1.msra.mxu0 0.0
    %509 = vmatprep.subr.mxu0 0.0
    %510 = vmatpush1.msra.mxu0 0.0
    %511 = vmatprep.subr.mxu0 0.0
    %512 = vmatpush1.msra.mxu0 0.0
    %513 = vmatprep.subr.mxu0 0.0
    %514 = vmatpush1.msra.mxu0 0.0
    %515 = vmatprep.mubr.f32.mxu0 0.0
    %516 = vmatmul.mubr.f32.gmra.mrb[0].mxu0 %v449
    %v517 = vpop.f32.mrb[0].mxu0
    %v518 = vadd.f32 0.0, %v517
    %v519 = vpop.f32.mrb[0].mxu0
    %520 = vdwg.mxu0
    %v522 = vrot.slane %v518, 5
    %v524 = vadd.f32 %v220, %v522
    %v525 = vtanh.pop %v524
    %v527 = vrot.slane %v525, 3
    %529 = vmatprep.subr.mxu0 0.0
    %530 = vmatpush1.msra.mxu0 %v130
    %531 = vmatprep.subr.mxu0 0.0
    %532 = vmatpush1.msra.mxu0 %v131
    %533 = vmatprep.subr.mxu0 0.0
    %534 = vmatpush1.msra.mxu0 %v132
    %535 = vmatprep.subr.mxu0 0.0
    %536 = vmatpush1.msra.mxu0 %v133
    %537 = vmatprep.subr.mxu0 0.0
    %538 = vmatpush1.msra.mxu0 %v134
    %539 = vmatprep.subr.mxu0 0.0
    %540 = vmatpush1.msra.mxu0 %v135
    %541 = vmatprep.subr.mxu0 0.0
    %542 = vmatpush1.msra.mxu0 %v136
    %543 = vmatprep.subr.mxu0 0.0
    %544 = vmatpush1.msra.mxu0 %v137
    %545 = vmatprep.subr.mxu0 0.0
    %546 = vmatpush1.msra.mxu0 %v138
    %547 = vmatprep.subr.mxu0 0.0
    %548 = vmatpush1.msra.mxu0 %v139
    %549 = vmatprep.subr.mxu0 0.0
    %550 = vmatpush1.msra.mxu0 %v140
    %551 = vmatprep.subr.mxu0 0.0
    %552 = vmatpush1.msra.mxu0 %v141
    %553 = vmatprep.subr.mxu0 0.0
    %554 = vmatpush1.msra.mxu0 %v142
    %555 = vmatprep.subr.mxu0 0.0
    %556 = vmatpush1.msra.mxu0 %v143
    %557 = vmatprep.subr.mxu0 0.0
    %558 = vmatpush1.msra.mxu0 %v144
    %559 = vmatprep.subr.mxu0 0.0
    %560 = vmatpush1.msra.mxu0 %v145
    %561 = vmatprep.subr.mxu0 0.0
    %562 = vmatpush1.msra.mxu0 0.0
    %563 = vmatprep.subr.mxu0 0.0
    %564 = vmatpush1.msra.mxu0 0.0
    %565 = vmatprep.subr.mxu0 0.0
    %566 = vmatpush1.msra.mxu0 0.0
    %567 = vmatprep.subr.mxu0 0.0
    %568 = vmatpush1.msra.mxu0 0.0
    %569 = vmatprep.subr.mxu0 0.0
    %570 = vmatpush1.msra.mxu0 0.0
    %571 = vmatprep.subr.mxu0 0.0
    %572 = vmatpush1.msra.mxu0 0.0
    %573 = vmatprep.subr.mxu0 0.0
    %574 = vmatpush1.msra.mxu0 0.0
    %575 = vmatprep.subr.mxu0 0.0
    %576 = vmatpush1.msra.mxu0 0.0
    %577 = vmatprep.subr.mxu0 0.0
    %578 = vmatpush1.msra.mxu0 0.0
    %579 = vmatprep.subr.mxu0 0.0
    %580 = vmatpush1.msra.mxu0 0.0
    %581 = vmatprep.subr.mxu0 0.0
    %582 = vmatpush1.msra.mxu0 0.0
    %583 = vmatprep.subr.mxu0 0.0
    %584 = vmatpush1.msra.mxu0 0.0
    %585 = vmatprep.subr.mxu0 0.0
    %586 = vmatpush1.msra.mxu0 0.0
    %587 = vmatprep.subr.mxu0 0.0
    %588 = vmatpush1.msra.mxu0 0.0
    %589 = vmatprep.subr.mxu0 0.0
    %590 = vmatpush1.msra.mxu0 0.0
    %591 = vmatprep.subr.mxu0 0.0
    %592 = vmatpush1.msra.mxu0 0.0
    %593 = vmatprep.mubr.f32.mxu0 0.0
    %594 = vmatmul.mubr.f32.gmra.mrb[0].mxu0 %v527
    %v595 = vpop.f32.mrb[0].mxu0
    %v596 = vadd.f32 0.0, %v595
    %v597 = vpop.f32.mrb[0].mxu0
    %598 = vdwg.mxu0
    %v600 = vrot.slane %v596, 4
    %v602 = vadd.f32 %v220, %v600
    %v603 = vtanh.pop %v602
    %v605 = vrot.slane %v603, 4
    %607 = vmatprep.subr.mxu0 0.0
    %608 = vmatpush1.msra.mxu0 %v130
    %609 = vmatprep.subr.mxu0 0.0
    %610 = vmatpush1.msra.mxu0 %v131
    %611 = vmatprep.subr.mxu0 0.0
    %612 = vmatpush1.msra.mxu0 %v132
    %613 = vmatprep.subr.mxu0 0.0
    %614 = vmatpush1.msra.mxu0 %v133
    %615 = vmatprep.subr.mxu0 0.0
    %616 = vmatpush1.msra.mxu0 %v134
    %617 = vmatprep.subr.mxu0 0.0
    %618 = vmatpush1.msra.mxu0 %v135
    %619 = vmatprep.subr.mxu0 0.0
    %620 = vmatpush1.msra.mxu0 %v136
    %621 = vmatprep.subr.mxu0 0.0
    %622 = vmatpush1.msra.mxu0 %v137
    %623 = vmatprep.subr.mxu0 0.0
    %624 = vmatpush1.msra.mxu0 %v138
    %625 = vmatprep.subr.mxu0 0.0
    %626 = vmatpush1.msra.mxu0 %v139
    %627 = vmatprep.subr.mxu0 0.0
    %628 = vmatpush1.msra.mxu0 %v140
    %629 = vmatprep.subr.mxu0 0.0
    %630 = vmatpush1.msra.mxu0 %v141
    %631 = vmatprep.subr.mxu0 0.0
    %632 = vmatpush1.msra.mxu0 %v142
    %633 = vmatprep.subr.mxu0 0.0
    %634 = vmatpush1.msra.mxu0 %v143
    %635 = vmatprep.subr.mxu0 0.0
    %636 = vmatpush1.msra.mxu0 %v144
    %637 = vmatprep.subr.mxu0 0.0
    %638 = vmatpush1.msra.mxu0 %v145
    %639 = vmatprep.subr.mxu0 0.0
    %640 = vmatpush1.msra.mxu0 0.0
    %641 = vmatprep.subr.mxu0 0.0
    %642 = vmatpush1.msra.mxu0 0.0
    %643 = vmatprep.subr.mxu0 0.0
    %644 = vmatpush1.msra.mxu0 0.0
    %645 = vmatprep.subr.mxu0 0.0
    %646 = vmatpush1.msra.mxu0 0.0
    %647 = vmatprep.subr.mxu0 0.0
    %648 = vmatpush1.msra.mxu0 0.0
    %649 = vmatprep.subr.mxu0 0.0
    %650 = vmatpush1.msra.mxu0 0.0
    %651 = vmatprep.subr.mxu0 0.0
    %652 = vmatpush1.msra.mxu0 0.0
    %653 = vmatprep.subr.mxu0 0.0
    %654 = vmatpush1.msra.mxu0 0.0
    %655 = vmatprep.subr.mxu0 0.0
    %656 = vmatpush1.msra.mxu0 0.0
    %657 = vmatprep.subr.mxu0 0.0
    %658 = vmatpush1.msra.mxu0 0.0
    %659 = vmatprep.subr.mxu0 0.0
    %660 = vmatpush1.msra.mxu0 0.0
    %661 = vmatprep.subr.mxu0 0.0
    %662 = vmatpush1.msra.mxu0 0.0
    %663 = vmatprep.subr.mxu0 0.0
    %664 = vmatpush1.msra.mxu0 0.0
    %665 = vmatprep.subr.mxu0 0.0
    %666 = vmatpush1.msra.mxu0 0.0
    %667 = vmatprep.subr.mxu0 0.0
    %668 = vmatpush1.msra.mxu0 0.0
    %669 = vmatprep.subr.mxu0 0.0
    %670 = vmatpush1.msra.mxu0 0.0
    %671 = vmatprep.mubr.f32.mxu0 0.0
    %672 = vmatmul.mubr.f32.gmra.mrb[0].mxu0 %v605
    %v673 = vpop.f32.mrb[0].mxu0
    %v674 = vadd.f32 0.0, %v673
    %v675 = vpop.f32.mrb[0].mxu0
    %676 = vdwg.mxu0
    %v678 = vrot.slane %v674, 3
    %v680 = vadd.f32 %v220, %v678
    %v681 = vtanh.pop %v680
    %v683 = vrot.slane %v681, 5
    %685 = vmatprep.subr.mxu0 0.0
    %686 = vmatpush1.msra.mxu0 %v130
    %687 = vmatprep.subr.mxu0 0.0
    %688 = vmatpush1.msra.mxu0 %v131
    %689 = vmatprep.subr.mxu0 0.0
    %690 = vmatpush1.msra.mxu0 %v132
    %691 = vmatprep.subr.mxu0 0.0
    %692 = vmatpush1.msra.mxu0 %v133
    %693 = vmatprep.subr.mxu0 0.0
    %694 = vmatpush1.msra.mxu0 %v134
    %695 = vmatprep.subr.mxu0 0.0
    %696 = vmatpush1.msra.mxu0 %v135
    %697 = vmatprep.subr.mxu0 0.0
    %698 = vmatpush1.msra.mxu0 %v136
    %699 = vmatprep.subr.mxu0 0.0
    %700 = vmatpush1.msra.mxu0 %v137
    %701 = vmatprep.subr.mxu0 0.0
    %702 = vmatpush1.msra.mxu0 %v138
    %703 = vmatprep.subr.mxu0 0.0
    %704 = vmatpush1.msra.mxu0 %v139
    %705 = vmatprep.subr.mxu0 0.0
    %706 = vmatpush1.msra.mxu0 %v140
    %707 = vmatprep.subr.mxu0 0.0
    %708 = vmatpush1.msra.mxu0 %v141
    %709 = vmatprep.subr.mxu0 0.0
    %710 = vmatpush1.msra.mxu0 %v142
    %711 = vmatprep.subr.mxu0 0.0
    %712 = vmatpush1.msra.mxu0 %v143
    %713 = vmatprep.subr.mxu0 0.0
    %714 = vmatpush1.msra.mxu0 %v144
    %715 = vmatprep.subr.mxu0 0.0
    %716 = vmatpush1.msra.mxu0 %v145
    %717 = vmatprep.subr.mxu0 0.0
    %718 = vmatpush1.msra.mxu0 0.0
    %719 = vmatprep.subr.mxu0 0.0
    %720 = vmatpush1.msra.mxu0 0.0
    %721 = vmatprep.subr.mxu0 0.0
    %722 = vmatpush1.msra.mxu0 0.0
    %723 = vmatprep.subr.mxu0 0.0
    %724 = vmatpush1.msra.mxu0 0.0
    %725 = vmatprep.subr.mxu0 0.0
    %726 = vmatpush1.msra.mxu0 0.0
    %727 = vmatprep.subr.mxu0 0.0
    %728 = vmatpush1.msra.mxu0 0.0
    %729 = vmatprep.subr.mxu0 0.0
    %730 = vmatpush1.msra.mxu0 0.0
    %731 = vmatprep.subr.mxu0 0.0
    %732 = vmatpush1.msra.mxu0 0.0
    %733 = vmatprep.subr.mxu0 0.0
    %734 = vmatpush1.msra.mxu0 0.0
    %735 = vmatprep.subr.mxu0 0.0
    %736 = vmatpush1.msra.mxu0 0.0
    %737 = vmatprep.subr.mxu0 0.0
    %738 = vmatpush1.msra.mxu0 0.0
    %739 = vmatprep.subr.mxu0 0.0
    %740 = vmatpush1.msra.mxu0 0.0
    %741 = vmatprep.subr.mxu0 0.0
    %742 = vmatpush1.msra.mxu0 0.0
    %743 = vmatprep.subr.mxu0 0.0
    %744 = vmatpush1.msra.mxu0 0.0
    %745 = vmatprep.subr.mxu0 0.0
    %746 = vmatpush1.msra.mxu0 0.0
    %747 = vmatprep.subr.mxu0 0.0
    %748 = vmatpush1.msra.mxu0 0.0
    %749 = vmatprep.mubr.f32.mxu0 0.0
    %750 = vmatmul.mubr.f32.gmra.mrb[0].mxu0 %v683
    %v751 = vpop.f32.mrb[0].mxu0
    %v752 = vadd.f32 0.0, %v751
    %v753 = vpop.f32.mrb[0].mxu0
    %754 = vdwg.mxu0
    %v756 = vrot.slane %v752, 2
    %v758 = vadd.f32 %v220, %v756
    %v759 = vtanh.pop %v758
    %v761 = vrot.slane %v759, 6
    %763 = vmatprep.subr.mxu0 0.0
    %764 = vmatpush1.msra.mxu0 %v130
    %765 = vmatprep.subr.mxu0 0.0
    %766 = vmatpush1.msra.mxu0 %v131
    %767 = vmatprep.subr.mxu0 0.0
    %768 = vmatpush1.msra.mxu0 %v132
    %769 = vmatprep.subr.mxu0 0.0
    %770 = vmatpush1.msra.mxu0 %v133
    %771 = vmatprep.subr.mxu0 0.0
    %772 = vmatpush1.msra.mxu0 %v134
    %773 = vmatprep.subr.mxu0 0.0
    %774 = vmatpush1.msra.mxu0 %v135
    %775 = vmatprep.subr.mxu0 0.0
    %776 = vmatpush1.msra.mxu0 %v136
    %777 = vmatprep.subr.mxu0 0.0
    %778 = vmatpush1.msra.mxu0 %v137
    %779 = vmatprep.subr.mxu0 0.0
    %780 = vmatpush1.msra.mxu0 %v138
    %781 = vmatprep.subr.mxu0 0.0
    %782 = vmatpush1.msra.mxu0 %v139
    %783 = vmatprep.subr.mxu0 0.0
    %784 = vmatpush1.msra.mxu0 %v140
    %785 = vmatprep.subr.mxu0 0.0
    %786 = vmatpush1.msra.mxu0 %v141
    %787 = vmatprep.subr.mxu0 0.0
    %788 = vmatpush1.msra.mxu0 %v142
    %789 = vmatprep.subr.mxu0 0.0
    %790 = vmatpush1.msra.mxu0 %v143
    %791 = vmatprep.subr.mxu0 0.0
    %792 = vmatpush1.msra.mxu0 %v144
    %793 = vmatprep.subr.mxu0 0.0
    %794 = vmatpush1.msra.mxu0 %v145
    %795 = vmatprep.subr.mxu0 0.0
    %796 = vmatpush1.msra.mxu0 0.0
    %797 = vmatprep.subr.mxu0 0.0
    %798 = vmatpush1.msra.mxu0 0.0
    %799 = vmatprep.subr.mxu0 0.0
    %800 = vmatpush1.msra.mxu0 0.0
    %801 = vmatprep.subr.mxu0 0.0
    %802 = vmatpush1.msra.mxu0 0.0
    %803 = vmatprep.subr.mxu0 0.0
    %804 = vmatpush1.msra.mxu0 0.0
    %805 = vmatprep.subr.mxu0 0.0
    %806 = vmatpush1.msra.mxu0 0.0
    %807 = vmatprep.subr.mxu0 0.0
    %808 = vmatpush1.msra.mxu0 0.0
    %809 = vmatprep.subr.mxu0 0.0
    %810 = vmatpush1.msra.mxu0 0.0
    %811 = vmatprep.subr.mxu0 0.0
    %812 = vmatpush1.msra.mxu0 0.0
    %813 = vmatprep.subr.mxu0 0.0
    %814 = vmatpush1.msra.mxu0 0.0
    %815 = vmatprep.subr.mxu0 0.0
    %816 = vmatpush1.msra.mxu0 0.0
    %817 = vmatprep.subr.mxu0 0.0
    %818 = vmatpush1.msra.mxu0 0.0
    %819 = vmatprep.subr.mxu0 0.0
    %820 = vmatpush1.msra.mxu0 0.0
    %821 = vmatprep.subr.mxu0 0.0
    %822 = vmatpush1.msra.mxu0 0.0
    %823 = vmatprep.subr.mxu0 0.0
    %824 = vmatpush1.msra.mxu0 0.0
    %825 = vmatprep.subr.mxu0 0.0
    %826 = vmatpush1.msra.mxu0 0.0
    %827 = vmatprep.mubr.f32.mxu0 0.0
    %828 = vmatmul.mubr.f32.gmra.mrb[0].mxu0 %v761
    %v829 = vpop.f32.mrb[0].mxu0
    %v830 = vadd.f32 0.0, %v829
    %v831 = vpop.f32.mrb[0].mxu0
    %832 = vdwg.mxu0
    %v834 = vrot.slane %v830, 1
    %v836 = vadd.f32 %v220, %v834
    %v837 = vtanh.pop %v836
    %vm838 = vcmask 1040384
    %v839 = vsel %vm838, %v294, %v369
    %vm840 = vcmask 1041408
    %v841 = vsel %vm840, %v839, %v447
    %vm842 = vcmask 1042432
    %v843 = vsel %vm842, %v841, %v525
    %vm844 = vcmask 1043456
    %v845 = vsel %vm844, %v843, %v603
    %vm846 = vcmask 1044480
    %v847 = vsel %vm846, %v845, %v681
    %vm848 = vcmask 1045504
    %v849 = vsel %vm848, %v847, %v759
    %vm850 = vcmask 1046528
    %v851 = vsel %vm850, %v849, %v837
    %v852 = vld [vmem:[#allocation8] sm:$0xff]
    %v853 = vld [vmem:[#allocation8 + $0x8] sm:$0xff]
    %v854 = vld [vmem:[#allocation8 + $0x10] sm:$0xff]
    %v855 = vld [vmem:[#allocation8 + $0x18] sm:$0xff]
    %v856 = vld [vmem:[#allocation8 + $0x20] sm:$0xff]
    %v857 = vld [vmem:[#allocation8 + $0x28] sm:$0xff]
    %v858 = vld [vmem:[#allocation8 + $0x30] sm:$0xff]
    %v859 = vld [vmem:[#allocation8 + $0x38] sm:$0xff]
    %v860 = vld [vmem:[#allocation8 + $0x40] sm:$0xff]
    %v861 = vld [vmem:[#allocation8 + $0x48] sm:$0xff]
    %v862 = vld [vmem:[#allocation8 + $0x50] sm:$0xff]
    %v863 = vld [vmem:[#allocation8 + $0x58] sm:$0xff]
    %v864 = vld [vmem:[#allocation8 + $0x60] sm:$0xff]
    %v865 = vld [vmem:[#allocation8 + $0x68] sm:$0xff]
    %v866 = vld [vmem:[#allocation8 + $0x70] sm:$0xff]
    %v867 = vld [vmem:[#allocation8 + $0x78] sm:$0xff]
    %v868 = vld [vmem:[#allocation10] sm:$0xff]
    %v869 = vld [vmem:[#allocation10 + $0x8] sm:$0xff]
    %v870 = vld [vmem:[#allocation10 + $0x10] sm:$0xff]
    %v871 = vld [vmem:[#allocation10 + $0x18] sm:$0xff]
    %v872 = vld [vmem:[#allocation10 + $0x20] sm:$0xff]
    %v873 = vld [vmem:[#allocation10 + $0x28] sm:$0xff]
    %v874 = vld [vmem:[#allocation10 + $0x30] sm:$0xff]
    %v875 = vld [vmem:[#allocation10 + $0x38] sm:$0xff]
    %v876 = vld [vmem:[#allocation10 + $0x40] sm:$0xff]
    %v877 = vld [vmem:[#allocation10 + $0x48] sm:$0xff]
    %v878 = vld [vmem:[#allocation10 + $0x50] sm:$0xff]
    %v879 = vld [vmem:[#allocation10 + $0x58] sm:$0xff]
    %v880 = vld [vmem:[#allocation10 + $0x60] sm:$0xff]
    %v881 = vld [vmem:[#allocation10 + $0x68] sm:$0xff]
    %v882 = vld [vmem:[#allocation10 + $0x70] sm:$0xff]
    %v883 = vld [vmem:[#allocation10 + $0x78] sm:$0xff]
    %v884 = vld [vmem:[%s6] sm:$0x1]
    %v886 = vlaneseq
    %v887 = vshrl.u32 %v886, 7
    %v888 = vsub.s32 0, %v887
    %v889 = vrot.slane %v884, %v888
    %891 = vmatprep.subr.mxu0 0.0
    %892 = vmatpush1.msra.mxu0 %v852
    %893 = vmatprep.subr.mxu0 0.0
    %894 = vmatpush1.msra.mxu0 %v853
    %895 = vmatprep.subr.mxu0 0.0
    %896 = vmatpush1.msra.mxu0 %v854
    %897 = vmatprep.subr.mxu0 0.0
    %898 = vmatpush1.msra.mxu0 %v855
    %899 = vmatprep.subr.mxu0 0.0
    %900 = vmatpush1.msra.mxu0 %v856
    %901 = vmatprep.subr.mxu0 0.0
    %902 = vmatpush1.msra.mxu0 %v857
    %903 = vmatprep.subr.mxu0 0.0
    %904 = vmatpush1.msra.mxu0 %v858
    %905 = vmatprep.subr.mxu0 0.0
    %906 = vmatpush1.msra.mxu0 %v859
    %907 = vmatprep.subr.mxu0 0.0
    %908 = vmatpush1.msra.mxu0 %v860
    %909 = vmatprep.subr.mxu0 0.0
    %910 = vmatpush1.msra.mxu0 %v861
    %911 = vmatprep.subr.mxu0 0.0
    %912 = vmatpush1.msra.mxu0 %v862
    %913 = vmatprep.subr.mxu0 0.0
    %914 = vmatpush1.msra.mxu0 %v863
    %915 = vmatprep.subr.mxu0 0.0
    %916 = vmatpush1.msra.mxu0 %v864
    %917 = vmatprep.subr.mxu0 0.0
    %918 = vmatpush1.msra.mxu0 %v865
    %919 = vmatprep.subr.mxu0 0.0
    %920 = vmatpush1.msra.mxu0 %v866
    %921 = vmatprep.subr.mxu0 0.0
    %922 = vmatpush1.msra.mxu0 %v867
    %923 = vmatprep.subr.mxu0 0.0
    %924 = vmatpush1.msra.mxu0 0.0
    %925 = vmatprep.subr.mxu0 0.0
    %926 = vmatpush1.msra.mxu0 0.0
    %927 = vmatprep.subr.mxu0 0.0
    %928 = vmatpush1.msra.mxu0 0.0
    %929 = vmatprep.subr.mxu0 0.0
    %930 = vmatpush1.msra.mxu0 0.0
    %931 = vmatprep.subr.mxu0 0.0
    %932 = vmatpush1.msra.mxu0 0.0
    %933 = vmatprep.subr.mxu0 0.0
    %934 = vmatpush1.msra.mxu0 0.0
    %935 = vmatprep.subr.mxu0 0.0
    %936 = vmatpush1.msra.mxu0 0.0
    %937 = vmatprep.subr.mxu0 0.0
    %938 = vmatpush1.msra.mxu0 0.0
    %939 = vmatprep.subr.mxu0 0.0
    %940 = vmatpush1.msra.mxu0 0.0
    %941 = vmatprep.subr.mxu0 0.0
    %942 = vmatpush1.msra.mxu0 0.0
    %943 = vmatprep.subr.mxu0 0.0
    %944 = vmatpush1.msra.mxu0 0.0
    %945 = vmatprep.subr.mxu0 0.0
    %946 = vmatpush1.msra.mxu0 0.0
    %947 = vmatprep.subr.mxu0 0.0
    %948 = vmatpush1.msra.mxu0 0.0
    %949 = vmatprep.subr.mxu0 0.0
    %950 = vmatpush1.msra.mxu0 0.0
    %951 = vmatprep.subr.mxu0 0.0
    %952 = vmatpush1.msra.mxu0 0.0
    %953 = vmatprep.subr.mxu0 0.0
    %954 = vmatpush1.msra.mxu0 0.0
    %955 = vmatprep.mubr.f32.mxu0 0.0
    %956 = vmatmul.mubr.f32.gmra.mrb[0].mxu0 %v851
    %v957 = vpop.f32.mrb[0].mxu0
    %v958 = vadd.f32 %v889, %v957
    %v959 = vpop.f32.mrb[0].mxu0
    %960 = vdwg.mxu0
    %961 = vmatprep.subr.mxu0 0.0
    %962 = vmatpush1.msra.mxu0 %v868
    %963 = vmatprep.subr.mxu0 0.0
    %964 = vmatpush1.msra.mxu0 %v869
    %965 = vmatprep.subr.mxu0 0.0
    %966 = vmatpush1.msra.mxu0 %v870
    %967 = vmatprep.subr.mxu0 0.0
    %968 = vmatpush1.msra.mxu0 %v871
    %969 = vmatprep.subr.mxu0 0.0
    %970 = vmatpush1.msra.mxu0 %v872
    %971 = vmatprep.subr.mxu0 0.0
    %972 = vmatpush1.msra.mxu0 %v873
    %973 = vmatprep.subr.mxu0 0.0
    %974 = vmatpush1.msra.mxu0 %v874
    %975 = vmatprep.subr.mxu0 0.0
    %976 = vmatpush1.msra.mxu0 %v875
    %977 = vmatprep.subr.mxu0 0.0
    %978 = vmatpush1.msra.mxu0 %v876
    %979 = vmatprep.subr.mxu0 0.0
    %980 = vmatpush1.msra.mxu0 %v877
    %981 = vmatprep.subr.mxu0 0.0
    %982 = vmatpush1.msra.mxu0 %v878
    %983 = vmatprep.subr.mxu0 0.0
    %984 = vmatpush1.msra.mxu0 %v879
    %985 = vmatprep.subr.mxu0 0.0
    %986 = vmatpush1.msra.mxu0 %v880
    %987 = vmatprep.subr.mxu0 0.0
    %988 = vmatpush1.msra.mxu0 %v881
    %989 = vmatprep.subr.mxu0 0.0
    %990 = vmatpush1.msra.mxu0 %v882
    %991 = vmatprep.subr.mxu0 0.0
    %992 = vmatpush1.msra.mxu0 %v883
    %993 = vmatprep.subr.mxu0 0.0
    %994 = vmatpush1.msra.mxu0 0.0
    %995 = vmatprep.subr.mxu0 0.0
    %996 = vmatpush1.msra.mxu0 0.0
    %997 = vmatprep.subr.mxu0 0.0
    %998 = vmatpush1.msra.mxu0 0.0
    %999 = vmatprep.subr.mxu0 0.0
    %1000 = vmatpush1.msra.mxu0 0.0
    %1001 = vmatprep.subr.mxu0 0.0
    %1002 = vmatpush1.msra.mxu0 0.0
    %1003 = vmatprep.subr.mxu0 0.0
    %1004 = vmatpush1.msra.mxu0 0.0
    %1005 = vmatprep.subr.mxu0 0.0
    %1006 = vmatpush1.msra.mxu0 0.0
    %1007 = vmatprep.subr.mxu0 0.0
    %1008 = vmatpush1.msra.mxu0 0.0
    %1009 = vmatprep.subr.mxu0 0.0
    %1010 = vmatpush1.msra.mxu0 0.0
    %1011 = vmatprep.subr.mxu0 0.0
    %1012 = vmatpush1.msra.mxu0 0.0
    %1013 = vmatprep.subr.mxu0 0.0
    %1014 = vmatpush1.msra.mxu0 0.0
    %1015 = vmatprep.subr.mxu0 0.0
    %1016 = vmatpush1.msra.mxu0 0.0
    %1017 = vmatprep.subr.mxu0 0.0
    %1018 = vmatpush1.msra.mxu0 0.0
    %1019 = vmatprep.subr.mxu0 0.0
    %1020 = vmatpush1.msra.mxu0 0.0
    %1021 = vmatprep.subr.mxu0 0.0
    %1022 = vmatpush1.msra.mxu0 0.0
    %1023 = vmatprep.subr.mxu0 0.0
    %1024 = vmatpush1.msra.mxu0 0.0
    %1025 = vmatprep.mubr.f32.mxu0 0.0
    %1026 = vmatmul.mubr.f32.gmra.mrb[0].mxu0 0.0
    %v1027 = vpop.f32.mrb[0].mxu0
    %v1028 = vadd.f32 0.0, %v1027
    %v1029 = vpop.f32.mrb[0].mxu0
    %1030 = vdwg.mxu0
    %v1031 = vadd.f32 %v958, %v1028
    %v1032 = vtanh.pop %v1031
    %1033 = vmatprep.subr.mxu0 0.0
    %1034 = vmatpush1.msra.mxu0 %v868
    %1035 = vmatprep.subr.mxu0 0.0
    %1036 = vmatpush1.msra.mxu0 %v869
    %1037 = vmatprep.subr.mxu0 0.0
    %1038 = vmatpush1.msra.mxu0 %v870
    %1039 = vmatprep.subr.mxu0 0.0
    %1040 = vmatpush1.msra.mxu0 %v871
    %1041 = vmatprep.subr.mxu0 0.0
    %1042 = vmatpush1.msra.mxu0 %v872
    %1043 = vmatprep.subr.mxu0 0.0
    %1044 = vmatpush1.msra.mxu0 %v873
    %1045 = vmatprep.subr.mxu0 0.0
    %1046 = vmatpush1.msra.mxu0 %v874
    %1047 = vmatprep.subr.mxu0 0.0
    %1048 = vmatpush1.msra.mxu0 %v875
    %1049 = vmatprep.subr.mxu0 0.0
    %1050 = vmatpush1.msra.mxu0 %v876
    %1051 = vmatprep.subr.mxu0 0.0
    %1052 = vmatpush1.msra.mxu0 %v877
    %1053 = vmatprep.subr.mxu0 0.0
    %1054 = vmatpush1.msra.mxu0 %v878
    %1055 = vmatprep.subr.mxu0 0.0
    %1056 = vmatpush1.msra.mxu0 %v879
    %1057 = vmatprep.subr.mxu0 0.0
    %1058 = vmatpush1.msra.mxu0 %v880
    %1059 = vmatprep.subr.mxu0 0.0
    %1060 = vmatpush1.msra.mxu0 %v881
    %1061 = vmatprep.subr.mxu0 0.0
    %1062 = vmatpush1.msra.mxu0 %v882
    %1063 = vmatprep.subr.mxu0 0.0
    %1064 = vmatpush1.msra.mxu0 %v883
    %1065 = vmatprep.subr.mxu0 0.0
    %1066 = vmatpush1.msra.mxu0 0.0
    %1067 = vmatprep.subr.mxu0 0.0
    %1068 = vmatpush1.msra.mxu0 0.0
    %1069 = vmatprep.subr.mxu0 0.0
    %1070 = vmatpush1.msra.mxu0 0.0
    %1071 = vmatprep.subr.mxu0 0.0
    %1072 = vmatpush1.msra.mxu0 0.0
    %1073 = vmatprep.subr.mxu0 0.0
    %1074 = vmatpush1.msra.mxu0 0.0
    %1075 = vmatprep.subr.mxu0 0.0
    %1076 = vmatpush1.msra.mxu0 0.0
    %1077 = vmatprep.subr.mxu0 0.0
    %1078 = vmatpush1.msra.mxu0 0.0
    %1079 = vmatprep.subr.mxu0 0.0
    %1080 = vmatpush1.msra.mxu0 0.0
    %1081 = vmatprep.subr.mxu0 0.0
    %1082 = vmatpush1.msra.mxu0 0.0
    %1083 = vmatprep.subr.mxu0 0.0
    %1084 = vmatpush1.msra.mxu0 0.0
    %1085 = vmatprep.subr.mxu0 0.0
    %1086 = vmatpush1.msra.mxu0 0.0
    %1087 = vmatprep.subr.mxu0 0.0
    %1088 = vmatpush1.msra.mxu0 0.0
    %1089 = vmatprep.subr.mxu0 0.0
    %1090 = vmatpush1.msra.mxu0 0.0
    %1091 = vmatprep.subr.mxu0 0.0
    %1092 = vmatpush1.msra.mxu0 0.0
    %1093 = vmatprep.subr.mxu0 0.0
    %1094 = vmatpush1.msra.mxu0 0.0
    %1095 = vmatprep.subr.mxu0 0.0
    %1096 = vmatpush1.msra.mxu0 0.0
    %1097 = vmatprep.mubr.f32.mxu0 0.0
    %1098 = vmatmul.mubr.f32.gmra.mrb[0].mxu0 %v1032
    %v1099 = vpop.f32.mrb[0].mxu0
    %v1100 = vadd.f32 0.0, %v1099
    %v1101 = vpop.f32.mrb[0].mxu0
    %1102 = vdwg.mxu0
    %v1104 = vrot.slane %v1100, 7
    %v1106 = vadd.f32 %v958, %v1104
    %v1107 = vtanh.pop %v1106
    %v1109 = vrot.slane %v1107, 1
    %1111 = vmatprep.subr.mxu0 0.0
    %1112 = vmatpush1.msra.mxu0 %v868
    %1113 = vmatprep.subr.mxu0 0.0
    %1114 = vmatpush1.msra.mxu0 %v869
    %1115 = vmatprep.subr.mxu0 0.0
    %1116 = vmatpush1.msra.mxu0 %v870
    %1117 = vmatprep.subr.mxu0 0.0
    %1118 = vmatpush1.msra.mxu0 %v871
    %1119 = vmatprep.subr.mxu0 0.0
    %1120 = vmatpush1.msra.mxu0 %v872
    %1121 = vmatprep.subr.mxu0 0.0
    %1122 = vmatpush1.msra.mxu0 %v873
    %1123 = vmatprep.subr.mxu0 0.0
    %1124 = vmatpush1.msra.mxu0 %v874
    %1125 = vmatprep.subr.mxu0 0.0
    %1126 = vmatpush1.msra.mxu0 %v875
    %1127 = vmatprep.subr.mxu0 0.0
    %1128 = vmatpush1.msra.mxu0 %v876
    %1129 = vmatprep.subr.mxu0 0.0
    %1130 = vmatpush1.msra.mxu0 %v877
    %1131 = vmatprep.subr.mxu0 0.0
    %1132 = vmatpush1.msra.mxu0 %v878
    %1133 = vmatprep.subr.mxu0 0.0
    %1134 = vmatpush1.msra.mxu0 %v879
    %1135 = vmatprep.subr.mxu0 0.0
    %1136 = vmatpush1.msra.mxu0 %v880
    %1137 = vmatprep.subr.mxu0 0.0
    %1138 = vmatpush1.msra.mxu0 %v881
    %1139 = vmatprep.subr.mxu0 0.0
    %1140 = vmatpush1.msra.mxu0 %v882
    %1141 = vmatprep.subr.mxu0 0.0
    %1142 = vmatpush1.msra.mxu0 %v883
    %1143 = vmatprep.subr.mxu0 0.0
    %1144 = vmatpush1.msra.mxu0 0.0
    %1145 = vmatprep.subr.mxu0 0.0
    %1146 = vmatpush1.msra.mxu0 0.0
    %1147 = vmatprep.subr.mxu0 0.0
    %1148 = vmatpush1.msra.mxu0 0.0
    %1149 = vmatprep.subr.mxu0 0.0
    %1150 = vmatpush1.msra.mxu0 0.0
    %1151 = vmatprep.subr.mxu0 0.0
    %1152 = vmatpush1.msra.mxu0 0.0
    %1153 = vmatprep.subr.mxu0 0.0
    %1154 = vmatpush1.msra.mxu0 0.0
    %1155 = vmatprep.subr.mxu0 0.0
    %1156 = vmatpush1.msra.mxu0 0.0
    %1157 = vmatprep.subr.mxu0 0.0
    %1158 = vmatpush1.msra.mxu0 0.0
    %1159 = vmatprep.subr.mxu0 0.0
    %1160 = vmatpush1.msra.mxu0 0.0
    %1161 = vmatprep.subr.mxu0 0.0
    %1162 = vmatpush1.msra.mxu0 0.0
    %1163 = vmatprep.subr.mxu0 0.0
    %1164 = vmatpush1.msra.mxu0 0.0
    %1165 = vmatprep.subr.mxu0 0.0
    %1166 = vmatpush1.msra.mxu0 0.0
    %1167 = vmatprep.subr.mxu0 0.0
    %1168 = vmatpush1.msra.mxu0 0.0
    %1169 = vmatprep.subr.mxu0 0.0
    %1170 = vmatpush1.msra.mxu0 0.0
    %1171 = vmatprep.subr.mxu0 0.0
    %1172 = vmatpush1.msra.mxu0 0.0
    %1173 = vmatprep.subr.mxu0 0.0
    %1174 = vmatpush1.msra.mxu0 0.0
    %1175 = vmatprep.mubr.f32.mxu0 0.0
    %1176 = vmatmul.mubr.f32.gmra.mrb[0].mxu0 %v1109
    %v1177 = vpop.f32.mrb[0].mxu0
    %v1178 = vadd.f32 0.0, %v1177
    %v1179 = vpop.f32.mrb[0].mxu0
    %1180 = vdwg.mxu0
    %v1182 = vrot.slane %v1178, 6
    %v1184 = vadd.f32 %v958, %v1182
    %v1185 = vtanh.pop %v1184
    %v1187 = vrot.slane %v1185, 2
    %1189 = vmatprep.subr.mxu0 0.0
    %1190 = vmatpush1.msra.mxu0 %v868
    %1191 = vmatprep.subr.mxu0 0.0
    %1192 = vmatpush1.msra.mxu0 %v869
    %1193 = vmatprep.subr.mxu0 0.0
    %1194 = vmatpush1.msra.mxu0 %v870
    %1195 = vmatprep.subr.mxu0 0.0
    %1196 = vmatpush1.msra.mxu0 %v871
    %1197 = vmatprep.subr.mxu0 0.0
    %1198 = vmatpush1.msra.mxu0 %v872
    %1199 = vmatprep.subr.mxu0 0.0
    %1200 = vmatpush1.msra.mxu0 %v873
    %1201 = vmatprep.subr.mxu0 0.0
    %1202 = vmatpush1.msra.mxu0 %v874
    %1203 = vmatprep.subr.mxu0 0.0
    %1204 = vmatpush1.msra.mxu0 %v875
    %1205 = vmatprep.subr.mxu0 0.0
    %1206 = vmatpush1.msra.mxu0 %v876
    %1207 = vmatprep.subr.mxu0 0.0
    %1208 = vmatpush1.msra.mxu0 %v877
    %1209 = vmatprep.subr.mxu0 0.0
    %1210 = vmatpush1.msra.mxu0 %v878
    %1211 = vmatprep.subr.mxu0 0.0
    %1212 = vmatpush1.msra.mxu0 %v879
    %1213 = vmatprep.subr.mxu0 0.0
    %1214 = vmatpush1.msra.mxu0 %v880
    %1215 = vmatprep.subr.mxu0 0.0
    %1216 = vmatpush1.msra.mxu0 %v881
    %1217 = vmatprep.subr.mxu0 0.0
    %1218 = vmatpush1.msra.mxu0 %v882
    %1219 = vmatprep.subr.mxu0 0.0
    %1220 = vmatpush1.msra.mxu0 %v883
    %1221 = vmatprep.subr.mxu0 0.0
    %1222 = vmatpush1.msra.mxu0 0.0
    %1223 = vmatprep.subr.mxu0 0.0
    %1224 = vmatpush1.msra.mxu0 0.0
    %1225 = vmatprep.subr.mxu0 0.0
    %1226 = vmatpush1.msra.mxu0 0.0
    %1227 = vmatprep.subr.mxu0 0.0
    %1228 = vmatpush1.msra.mxu0 0.0
    %1229 = vmatprep.subr.mxu0 0.0
    %1230 = vmatpush1.msra.mxu0 0.0
    %1231 = vmatprep.subr.mxu0 0.0
    %1232 = vmatpush1.msra.mxu0 0.0
    %1233 = vmatprep.subr.mxu0 0.0
    %1234 = vmatpush1.msra.mxu0 0.0
    %1235 = vmatprep.subr.mxu0 0.0
    %1236 = vmatpush1.msra.mxu0 0.0
    %1237 = vmatprep.subr.mxu0 0.0
    %1238 = vmatpush1.msra.mxu0 0.0
    %1239 = vmatprep.subr.mxu0 0.0
    %1240 = vmatpush1.msra.mxu0 0.0
    %1241 = vmatprep.subr.mxu0 0.0
    %1242 = vmatpush1.msra.mxu0 0.0
    %1243 = vmatprep.subr.mxu0 0.0
    %1244 = vmatpush1.msra.mxu0 0.0
    %1245 = vmatprep.subr.mxu0 0.0
    %1246 = vmatpush1.msra.mxu0 0.0
    %1247 = vmatprep.subr.mxu0 0.0
    %1248 = vmatpush1.msra.mxu0 0.0
    %1249 = vmatprep.subr.mxu0 0.0
    %1250 = vmatpush1.msra.mxu0 0.0
    %1251 = vmatprep.subr.mxu0 0.0
    %1252 = vmatpush1.msra.mxu0 0.0
    %1253 = vmatprep.mubr.f32.mxu0 0.0
    %1254 = vmatmul.mubr.f32.gmra.mrb[0].mxu0 %v1187
    %v1255 = vpop.f32.mrb[0].mxu0
    %v1256 = vadd.f32 0.0, %v1255
    %v1257 = vpop.f32.mrb[0].mxu0
    %1258 = vdwg.mxu0
    %v1260 = vrot.slane %v1256, 5
    %v1262 = vadd.f32 %v958, %v1260
    %v1263 = vtanh.pop %v1262
    %v1265 = vrot.slane %v1263, 3
    %1267 = vmatprep.subr.mxu0 0.0
    %1268 = vmatpush1.msra.mxu0 %v868
    %1269 = vmatprep.subr.mxu0 0.0
    %1270 = vmatpush1.msra.mxu0 %v869
    %1271 = vmatprep.subr.mxu0 0.0
    %1272 = vmatpush1.msra.mxu0 %v870
    %1273 = vmatprep.subr.mxu0 0.0
    %1274 = vmatpush1.msra.mxu0 %v871
    %1275 = vmatprep.subr.mxu0 0.0
    %1276 = vmatpush1.msra.mxu0 %v872
    %1277 = vmatprep.subr.mxu0 0.0
    %1278 = vmatpush1.msra.mxu0 %v873
    %1279 = vmatprep.subr.mxu0 0.0
    %1280 = vmatpush1.msra.mxu0 %v874
    %1281 = vmatprep.subr.mxu0 0.0
    %1282 = vmatpush1.msra.mxu0 %v875
    %1283 = vmatprep.subr.mxu0 0.0
    %1284 = vmatpush1.msra.mxu0 %v876
    %1285 = vmatprep.subr.mxu0 0.0
    %1286 = vmatpush1.msra.mxu0 %v877
    %1287 = vmatprep.subr.mxu0 0.0
    %1288 = vmatpush1.msra.mxu0 %v878
    %1289 = vmatprep.subr.mxu0 0.0
    %1290 = vmatpush1.msra.mxu0 %v879
    %1291 = vmatprep.subr.mxu0 0.0
    %1292 = vmatpush1.msra.mxu0 %v880
    %1293 = vmatprep.subr.mxu0 0.0
    %1294 = vmatpush1.msra.mxu0 %v881
    %1295 = vmatprep.subr.mxu0 0.0
    %1296 = vmatpush1.msra.mxu0 %v882
    %1297 = vmatprep.subr.mxu0 0.0
    %1298 = vmatpush1.msra.mxu0 %v883
    %1299 = vmatprep.subr.mxu0 0.0
    %1300 = vmatpush1.msra.mxu0 0.0
    %1301 = vmatprep.subr.mxu0 0.0
    %1302 = vmatpush1.msra.mxu0 0.0
    %1303 = vmatprep.subr.mxu0 0.0
    %1304 = vmatpush1.msra.mxu0 0.0
    %1305 = vmatprep.subr.mxu0 0.0
    %1306 = vmatpush1.msra.mxu0 0.0
    %1307 = vmatprep.subr.mxu0 0.0
    %1308 = vmatpush1.msra.mxu0 0.0
    %1309 = vmatprep.subr.mxu0 0.0
    %1310 = vmatpush1.msra.mxu0 0.0
    %1311 = vmatprep.subr.mxu0 0.0
    %1312 = vmatpush1.msra.mxu0 0.0
    %1313 = vmatprep.subr.mxu0 0.0
    %1314 = vmatpush1.msra.mxu0 0.0
    %1315 = vmatprep.subr.mxu0 0.0
    %1316 = vmatpush1.msra.mxu0 0.0
    %1317 = vmatprep.subr.mxu0 0.0
    %1318 = vmatpush1.msra.mxu0 0.0
    %1319 = vmatprep.subr.mxu0 0.0
    %1320 = vmatpush1.msra.mxu0 0.0
    %1321 = vmatprep.subr.mxu0 0.0
    %1322 = vmatpush1.msra.mxu0 0.0
    %1323 = vmatprep.subr.mxu0 0.0
    %1324 = vmatpush1.msra.mxu0 0.0
    %1325 = vmatprep.subr.mxu0 0.0
    %1326 = vmatpush1.msra.mxu0 0.0
    %1327 = vmatprep.subr.mxu0 0.0
    %1328 = vmatpush1.msra.mxu0 0.0
    %1329 = vmatprep.subr.mxu0 0.0
    %1330 = vmatpush1.msra.mxu0 0.0
    %1331 = vmatprep.mubr.f32.mxu0 0.0
    %1332 = vmatmul.mubr.f32.gmra.mrb[0].mxu0 %v1265
    %v1333 = vpop.f32.mrb[0].mxu0
    %v1334 = vadd.f32 0.0, %v1333
    %v1335 = vpop.f32.mrb[0].mxu0
    %1336 = vdwg.mxu0
    %v1338 = vrot.slane %v1334, 4
    %v1340 = vadd.f32 %v958, %v1338
    %v1341 = vtanh.pop %v1340
    %v1343 = vrot.slane %v1341, 4
    %1345 = vmatprep.subr.mxu0 0.0
    %1346 = vmatpush1.msra.mxu0 %v868
    %1347 = vmatprep.subr.mxu0 0.0
    %1348 = vmatpush1.msra.mxu0 %v869
    %1349 = vmatprep.subr.mxu0 0.0
    %1350 = vmatpush1.msra.mxu0 %v870
    %1351 = vmatprep.subr.mxu0 0.0
    %1352 = vmatpush1.msra.mxu0 %v871
    %1353 = vmatprep.subr.mxu0 0.0
    %1354 = vmatpush1.msra.mxu0 %v872
    %1355 = vmatprep.subr.mxu0 0.0
    %1356 = vmatpush1.msra.mxu0 %v873
    %1357 = vmatprep.subr.mxu0 0.0
    %1358 = vmatpush1.msra.mxu0 %v874
    %1359 = vmatprep.subr.mxu0 0.0
    %1360 = vmatpush1.msra.mxu0 %v875
    %1361 = vmatprep.subr.mxu0 0.0
    %1362 = vmatpush1.msra.mxu0 %v876
    %1363 = vmatprep.subr.mxu0 0.0
    %1364 = vmatpush1.msra.mxu0 %v877
    %1365 = vmatprep.subr.mxu0 0.0
    %1366 = vmatpush1.msra.mxu0 %v878
    %1367 = vmatprep.subr.mxu0 0.0
    %1368 = vmatpush1.msra.mxu0 %v879
    %1369 = vmatprep.subr.mxu0 0.0
    %1370 = vmatpush1.msra.mxu0 %v880
    %1371 = vmatprep.subr.mxu0 0.0
    %1372 = vmatpush1.msra.mxu0 %v881
    %1373 = vmatprep.subr.mxu0 0.0
    %1374 = vmatpush1.msra.mxu0 %v882
    %1375 = vmatprep.subr.mxu0 0.0
    %1376 = vmatpush1.msra.mxu0 %v883
    %1377 = vmatprep.subr.mxu0 0.0
    %1378 = vmatpush1.msra.mxu0 0.0
    %1379 = vmatprep.subr.mxu0 0.0
    %1380 = vmatpush1.msra.mxu0 0.0
    %1381 = vmatprep.subr.mxu0 0.0
    %1382 = vmatpush1.msra.mxu0 0.0
    %1383 = vmatprep.subr.mxu0 0.0
    %1384 = vmatpush1.msra.mxu0 0.0
    %1385 = vmatprep.subr.mxu0 0.0
    %1386 = vmatpush1.msra.mxu0 0.0
    %1387 = vmatprep.subr.mxu0 0.0
    %1388 = vmatpush1.msra.mxu0 0.0
    %1389 = vmatprep.subr.mxu0 0.0
    %1390 = vmatpush1.msra.mxu0 0.0
    %1391 = vmatprep.subr.mxu0 0.0
    %1392 = vmatpush1.msra.mxu0 0.0
    %1393 = vmatprep.subr.mxu0 0.0
    %1394 = vmatpush1.msra.mxu0 0.0
    %1395 = vmatprep.subr.mxu0 0.0
    %1396 = vmatpush1.msra.mxu0 0.0
    %1397 = vmatprep.subr.mxu0 0.0
    %1398 = vmatpush1.msra.mxu0 0.0
    %1399 = vmatprep.subr.mxu0 0.0
    %1400 = vmatpush1.msra.mxu0 0.0
    %1401 = vmatprep.subr.mxu0 0.0
    %1402 = vmatpush1.msra.mxu0 0.0
    %1403 = vmatprep.subr.mxu0 0.0
    %1404 = vmatpush1.msra.mxu0 0.0
    %1405 = vmatprep.subr.mxu0 0.0
    %1406 = vmatpush1.msra.mxu0 0.0
    %1407 = vmatprep.subr.mxu0 0.0
    %1408 = vmatpush1.msra.mxu0 0.0
    %1409 = vmatprep.mubr.f32.mxu0 0.0
    %1410 = vmatmul.mubr.f32.gmra.mrb[0].mxu0 %v1343
    %v1411 = vpop.f32.mrb[0].mxu0
    %v1412 = vadd.f32 0.0, %v1411
    %v1413 = vpop.f32.mrb[0].mxu0
    %1414 = vdwg.mxu0
    %v1416 = vrot.slane %v1412, 3
    %v1418 = vadd.f32 %v958, %v1416
    %v1419 = vtanh.pop %v1418
    %v1421 = vrot.slane %v1419, 5
    %1423 = vmatprep.subr.mxu0 0.0
    %1424 = vmatpush1.msra.mxu0 %v868
    %1425 = vmatprep.subr.mxu0 0.0
    %1426 = vmatpush1.msra.mxu0 %v869
    %1427 = vmatprep.subr.mxu0 0.0
    %1428 = vmatpush1.msra.mxu0 %v870
    %1429 = vmatprep.subr.mxu0 0.0
    %1430 = vmatpush1.msra.mxu0 %v871
    %1431 = vmatprep.subr.mxu0 0.0
    %1432 = vmatpush1.msra.mxu0 %v872
    %1433 = vmatprep.subr.mxu0 0.0
    %1434 = vmatpush1.msra.mxu0 %v873
    %1435 = vmatprep.subr.mxu0 0.0
    %1436 = vmatpush1.msra.mxu0 %v874
    %1437 = vmatprep.subr.mxu0 0.0
    %1438 = vmatpush1.msra.mxu0 %v875
    %1439 = vmatprep.subr.mxu0 0.0
    %1440 = vmatpush1.msra.mxu0 %v876
    %1441 = vmatprep.subr.mxu0 0.0
    %1442 = vmatpush1.msra.mxu0 %v877
    %1443 = vmatprep.subr.mxu0 0.0
    %1444 = vmatpush1.msra.mxu0 %v878
    %1445 = vmatprep.subr.mxu0 0.0
    %1446 = vmatpush1.msra.mxu0 %v879
    %1447 = vmatprep.subr.mxu0 0.0
    %1448 = vmatpush1.msra.mxu0 %v880
    %1449 = vmatprep.subr.mxu0 0.0
    %1450 = vmatpush1.msra.mxu0 %v881
    %1451 = vmatprep.subr.mxu0 0.0
    %1452 = vmatpush1.msra.mxu0 %v882
    %1453 = vmatprep.subr.mxu0 0.0
    %1454 = vmatpush1.msra.mxu0 %v883
    %1455 = vmatprep.subr.mxu0 0.0
    %1456 = vmatpush1.msra.mxu0 0.0
    %1457 = vmatprep.subr.mxu0 0.0
    %1458 = vmatpush1.msra.mxu0 0.0
    %1459 = vmatprep.subr.mxu0 0.0
    %1460 = vmatpush1.msra.mxu0 0.0
    %1461 = vmatprep.subr.mxu0 0.0
    %1462 = vmatpush1.msra.mxu0 0.0
    %1463 = vmatprep.subr.mxu0 0.0
    %1464 = vmatpush1.msra.mxu0 0.0
    %1465 = vmatprep.subr.mxu0 0.0
    %1466 = vmatpush1.msra.mxu0 0.0
    %1467 = vmatprep.subr.mxu0 0.0
    %1468 = vmatpush1.msra.mxu0 0.0
    %1469 = vmatprep.subr.mxu0 0.0
    %1470 = vmatpush1.msra.mxu0 0.0
    %1471 = vmatprep.subr.mxu0 0.0
    %1472 = vmatpush1.msra.mxu0 0.0
    %1473 = vmatprep.subr.mxu0 0.0
    %1474 = vmatpush1.msra.mxu0 0.0
    %1475 = vmatprep.subr.mxu0 0.0
    %1476 = vmatpush1.msra.mxu0 0.0
    %1477 = vmatprep.subr.mxu0 0.0
    %1478 = vmatpush1.msra.mxu0 0.0
    %1479 = vmatprep.subr.mxu0 0.0
    %1480 = vmatpush1.msra.mxu0 0.0
    %1481 = vmatprep.subr.mxu0 0.0
    %1482 = vmatpush1.msra.mxu0 0.0
    %1483 = vmatprep.subr.mxu0 0.0
    %1484 = vmatpush1.msra.mxu0 0.0
    %1485 = vmatprep.subr.mxu0 0.0
    %1486 = vmatpush1.msra.mxu0 0.0
    %1487 = vmatprep.mubr.f32.mxu0 0.0
    %1488 = vmatmul.mubr.f32.gmra.mrb[0].mxu0 %v1421
    %v1489 = vpop.f32.mrb[0].mxu0
    %v1490 = vadd.f32 0.0, %v1489
    %v1491 = vpop.f32.mrb[0].mxu0
    %1492 = vdwg.mxu0
    %v1494 = vrot.slane %v1490, 2
    %v1496 = vadd.f32 %v958, %v1494
    %v1497 = vtanh.pop %v1496
    %v1499 = vrot.slane %v1497, 6
    %1501 = vmatprep.subr.mxu0 0.0
    %1502 = vmatpush1.msra.mxu0 %v868
    %1503 = vmatprep.subr.mxu0 0.0
    %1504 = vmatpush1.msra.mxu0 %v869
    %1505 = vmatprep.subr.mxu0 0.0
    %1506 = vmatpush1.msra.mxu0 %v870
    %1507 = vmatprep.subr.mxu0 0.0
    %1508 = vmatpush1.msra.mxu0 %v871
    %1509 = vmatprep.subr.mxu0 0.0
    %1510 = vmatpush1.msra.mxu0 %v872
    %1511 = vmatprep.subr.mxu0 0.0
    %1512 = vmatpush1.msra.mxu0 %v873
    %1513 = vmatprep.subr.mxu0 0.0
    %1514 = vmatpush1.msra.mxu0 %v874
    %1515 = vmatprep.subr.mxu0 0.0
    %1516 = vmatpush1.msra.mxu0 %v875
    %1517 = vmatprep.subr.mxu0 0.0
    %1518 = vmatpush1.msra.mxu0 %v876
    %1519 = vmatprep.subr.mxu0 0.0
    %1520 = vmatpush1.msra.mxu0 %v877
    %1521 = vmatprep.subr.mxu0 0.0
    %1522 = vmatpush1.msra.mxu0 %v878
    %1523 = vmatprep.subr.mxu0 0.0
    %1524 = vmatpush1.msra.mxu0 %v879
    %1525 = vmatprep.subr.mxu0 0.0
    %1526 = vmatpush1.msra.mxu0 %v880
    %1527 = vmatprep.subr.mxu0 0.0
    %1528 = vmatpush1.msra.mxu0 %v881
    %1529 = vmatprep.subr.mxu0 0.0
    %1530 = vmatpush1.msra.mxu0 %v882
    %1531 = vmatprep.subr.mxu0 0.0
    %1532 = vmatpush1.msra.mxu0 %v883
    %1533 = vmatprep.subr.mxu0 0.0
    %1534 = vmatpush1.msra.mxu0 0.0
    %1535 = vmatprep.subr.mxu0 0.0
    %1536 = vmatpush1.msra.mxu0 0.0
    %1537 = vmatprep.subr.mxu0 0.0
    %1538 = vmatpush1.msra.mxu0 0.0
    %1539 = vmatprep.subr.mxu0 0.0
    %1540 = vmatpush1.msra.mxu0 0.0
    %1541 = vmatprep.subr.mxu0 0.0
    %1542 = vmatpush1.msra.mxu0 0.0
    %1543 = vmatprep.subr.mxu0 0.0
    %1544 = vmatpush1.msra.mxu0 0.0
    %1545 = vmatprep.subr.mxu0 0.0
    %1546 = vmatpush1.msra.mxu0 0.0
    %1547 = vmatprep.subr.mxu0 0.0
    %1548 = vmatpush1.msra.mxu0 0.0
    %1549 = vmatprep.subr.mxu0 0.0
    %1550 = vmatpush1.msra.mxu0 0.0
    %1551 = vmatprep.subr.mxu0 0.0
    %1552 = vmatpush1.msra.mxu0 0.0
    %1553 = vmatprep.subr.mxu0 0.0
    %1554 = vmatpush1.msra.mxu0 0.0
    %1555 = vmatprep.subr.mxu0 0.0
    %1556 = vmatpush1.msra.mxu0 0.0
    %1557 = vmatprep.subr.mxu0 0.0
    %1558 = vmatpush1.msra.mxu0 0.0
    %1559 = vmatprep.subr.mxu0 0.0
    %1560 = vmatpush1.msra.mxu0 0.0
    %1561 = vmatprep.subr.mxu0 0.0
    %1562 = vmatpush1.msra.mxu0 0.0
    %1563 = vmatprep.subr.mxu0 0.0
    %1564 = vmatpush1.msra.mxu0 0.0
    %1565 = vmatprep.mubr.f32.mxu0 0.0
    %1566 = vmatmul.mubr.f32.gmra.mrb[0].mxu0 %v1499
    %v1567 = vpop.f32.mrb[0].mxu0
    %v1568 = vadd.f32 0.0, %v1567
    %v1569 = vpop.f32.mrb[0].mxu0
    %1570 = vdwg.mxu0
    %v1572 = vrot.slane %v1568, 1
    %v1574 = vadd.f32 %v958, %v1572
    %v1575 = vtanh.pop %v1574
    %v1576 = vsel %vm838, %v1032, %v1107
    %v1577 = vsel %vm840, %v1576, %v1185
    %v1578 = vsel %vm842, %v1577, %v1263
    %v1579 = vsel %vm844, %v1578, %v1341
    %v1580 = vsel %vm846, %v1579, %v1419
    %v1581 = vsel %vm848, %v1580, %v1497
    %v1582 = vsel %vm850, %v1581, %v1575
    %v1583 = vld [vmem:[#allocation11] sm:$0xff]
    %v1584 = vld [vmem:[#allocation11 + $0x8] sm:$0xff]
    %v1585 = vld [vmem:[#allocation11 + $0x10] sm:$0xff]
    %v1586 = vld [vmem:[#allocation11 + $0x18] sm:$0xff]
    %v1587 = vld [vmem:[#allocation11 + $0x20] sm:$0xff]
    %v1588 = vld [vmem:[#allocation11 + $0x28] sm:$0xff]
    %v1589 = vld [vmem:[#allocation11 + $0x30] sm:$0xff]
    %v1590 = vld [vmem:[#allocation11 + $0x38] sm:$0xff]
    %v1591 = vld [vmem:[#allocation11 + $0x40] sm:$0xff]
    %v1592 = vld [vmem:[#allocation11 + $0x48] sm:$0xff]
    %v1593 = vld [vmem:[#allocation11 + $0x50] sm:$0xff]
    %v1594 = vld [vmem:[#allocation11 + $0x58] sm:$0xff]
    %v1595 = vld [vmem:[#allocation11 + $0x60] sm:$0xff]
    %v1596 = vld [vmem:[#allocation11 + $0x68] sm:$0xff]
    %v1597 = vld [vmem:[#allocation11 + $0x70] sm:$0xff]
    %v1598 = vld [vmem:[#allocation11 + $0x78] sm:$0xff]
    %v1599 = vld [vmem:[%s8] sm:$0x1]
    %v1601 = vlaneseq
    %v1602 = vshrl.u32 %v1601, 7
    %v1603 = vsub.s32 0, %v1602
    %v1604 = vrot.slane %v1599, %v1603
    %1606 = vmatprep.subr.mxu0 0.0
    %1607 = vmatpush1.msra.mxu0 %v1583
    %1608 = vmatprep.subr.mxu0 0.0
    %1609 = vmatpush1.msra.mxu0 %v1584
    %1610 = vmatprep.subr.mxu0 0.0
    %1611 = vmatpush1.msra.mxu0 %v1585
    %1612 = vmatprep.subr.mxu0 0.0
    %1613 = vmatpush1.msra.mxu0 %v1586
    %1614 = vmatprep.subr.mxu0 0.0
    %1615 = vmatpush1.msra.mxu0 %v1587
    %1616 = vmatprep.subr.mxu0 0.0
    %1617 = vmatpush1.msra.mxu0 %v1588
    %1618 = vmatprep.subr.mxu0 0.0
    %1619 = vmatpush1.msra.mxu0 %v1589
    %1620 = vmatprep.subr.mxu0 0.0
    %1621 = vmatpush1.msra.mxu0 %v1590
    %1622 = vmatprep.subr.mxu0 0.0
    %1623 = vmatpush1.msra.mxu0 %v1591
    %1624 = vmatprep.subr.mxu0 0.0
    %1625 = vmatpush1.msra.mxu0 %v1592
    %1626 = vmatprep.subr.mxu0 0.0
    %1627 = vmatpush1.msra.mxu0 %v1593
    %1628 = vmatprep.subr.mxu0 0.0
    %1629 = vmatpush1.msra.mxu0 %v1594
    %1630 = vmatprep.subr.mxu0 0.0
    %1631 = vmatpush1.msra.mxu0 %v1595
    %1632 = vmatprep.subr.mxu0 0.0
    %1633 = vmatpush1.msra.mxu0 %v1596
    %1634 = vmatprep.subr.mxu0 0.0
    %1635 = vmatpush1.msra.mxu0 %v1597
    %1636 = vmatprep.subr.mxu0 0.0
    %1637 = vmatpush1.msra.mxu0 %v1598
    %1638 = vmatprep.subr.mxu0 0.0
    %1639 = vmatpush1.msra.mxu0 0.0
    %1640 = vmatprep.subr.mxu0 0.0
    %1641 = vmatpush1.msra.mxu0 0.0
    %1642 = vmatprep.subr.mxu0 0.0
    %1643 = vmatpush1.msra.mxu0 0.0
    %1644 = vmatprep.subr.mxu0 0.0
    %1645 = vmatpush1.msra.mxu0 0.0
    %1646 = vmatprep.subr.mxu0 0.0
    %1647 = vmatpush1.msra.mxu0 0.0
    %1648 = vmatprep.subr.mxu0 0.0
    %1649 = vmatpush1.msra.mxu0 0.0
    %1650 = vmatprep.subr.mxu0 0.0
    %1651 = vmatpush1.msra.mxu0 0.0
    %1652 = vmatprep.subr.mxu0 0.0
    %1653 = vmatpush1.msra.mxu0 0.0
    %1654 = vmatprep.subr.mxu0 0.0
    %1655 = vmatpush1.msra.mxu0 0.0
    %1656 = vmatprep.subr.mxu0 0.0
    %1657 = vmatpush1.msra.mxu0 0.0
    %1658 = vmatprep.subr.mxu0 0.0
    %1659 = vmatpush1.msra.mxu0 0.0
    %1660 = vmatprep.subr.mxu0 0.0
    %1661 = vmatpush1.msra.mxu0 0.0
    %1662 = vmatprep.subr.mxu0 0.0
    %1663 = vmatpush1.msra.mxu0 0.0
    %1664 = vmatprep.subr.mxu0 0.0
    %1665 = vmatpush1.msra.mxu0 0.0
    %1666 = vmatprep.subr.mxu0 0.0
    %1667 = vmatpush1.msra.mxu0 0.0
    %1668 = vmatprep.subr.mxu0 0.0
    %1669 = vmatpush1.msra.mxu0 0.0
    %1670 = vmatprep.mubr.f32.mxu0 0.0
    %1671 = vmatmul.mubr.f32.gmra.mrb[0].mxu0 %v1582
    %v1672 = vpop.f32.mrb[0].mxu0
    %v1673 = vadd.f32 %v1604, %v1672
    %v1674 = vpop.f32.mrb[0].mxu0
    %1675 = vdwg.mxu0
    %1676 = vst [vmem:[#allocation13] sm:$0xff] %v1673
    // Predicated region
    $region62: #{tpu_custom_call.1} parent=1 // pred_check
      _
    $region63: #{tpu_custom_call.1} parent=1 // pred_check_branch
      %1678 = sbr.rel (0) target = $region65
    $region64: #{tpu_custom_call.1} parent=1 // pred_region
      %s1680 = ssub.s32 128, 128
      %1681 = vsyncadd [#allocation4], %s1680
      %s1683 = sshll.u32 [#allocation13], 4
      %s1684 = int_to_ptr.vmem [resolvable:$true] %s1683
      %1686 = dma.vmem_to_hbm [thread:$0]  %s1684, 128, %s9, [#allocation4]
    $region65: #{tpu_custom_call.1} parent=1 // pred_fallthru
      _
    // Predicated region
    $region66: #{tpu_custom_call.1} parent=1 // pred_check
      _
    $region67: #{tpu_custom_call.1} parent=1 // pred_check_branch
      %1688 = sbr.rel (0) target = $region69
    $region68: #{tpu_custom_call.1} parent=1 // pred_region
      %1689 = dma.done [#allocation4], 128
    $region69: #{tpu_custom_call.1} parent=1 // pred_fallthru
      _
    %1690 = vsyncpa [#allocation3], 1
    %1691 = vsyncpa [#allocation6], 1
    %1692 = vsyncpa [#allocation9], 1
    %1693 = vsyncpa [#allocation12], 1
    %1694 = vsyncpa [#allocation4], 1

</llo_original>
